<compile_context>
chip_gen: v5e
topology: v5e:2x2
jax: 0.10.0
libtpu: 0.0.40
codegen_flags: <defaults>
</compile_context>

<pallas_src>
import functools

import jax
import jax.numpy as jnp
from jax.experimental import pallas as pl
from jax.experimental.pallas import tpu as pltpu


# ----------------------------------------------------------------------------
# Fused Pallas kernel (all LSTM layers + MLP head, single invocation)
# ----------------------------------------------------------------------------
def build_fused_kernel(num_layers, batch, seq_len, hidden):
    L, B, S, H = num_layers, batch, seq_len, hidden

    def kernel(*refs):
        # refs = (x_tm, [w_ih_t(bf16), w_hh_t(bf16), b(f32)] * L,
        #         w1_t(bf16), b1, w2_pad, b2_pad, out, hseq_scratch)
        n_in = 1 + 3 * L + 4
        x_ref = refs[0]
        w1_ref, b1_ref, w2_ref, b2_ref = refs[1 + 3 * L: 1 + 3 * L + 4]
        out_ref = refs[n_in]
        hseq_ref = refs[n_in + 1]          # VMEM scratch (S*B, H) f32

        # Lane mask for the g-gate (tanh lanes). Computed once, reused by every
        # unrolled step of every layer (kept outside the loops: no per-iter
        # broadcast_in_dim).
        lane = jax.lax.broadcasted_iota(jnp.int32, (B, 4 * H), 1)
        g_mask = (lane >= 2 * H) & (lane < 3 * H)

        # Time-major flat layer input, rows ordered t*B + b.
        xin = x_ref[...]                                    # (S*B, Din) f32

        hn_rows = []
        for l in range(L):
            # Hoisted, one-time per layer: bf16 -> f32 weight upcast.
            wih = refs[1 + 3 * l][...].astype(jnp.float32)   # (Din, 4H)
            whh = refs[2 + 3 * l][...].astype(jnp.float32)   # (H,   4H)
            bias = refs[3 + 3 * l][...]                      # (1,   4H)

            # Hoisted input projection: one matmul for the whole sequence.
            gx = (jnp.dot(xin, wih, preferred_element_type=jnp.float32)
                  + bias)                                    # (S*B, 4H), i|f|g|o

            h = jnp.zeros((B, H), jnp.float32)
            c = jnp.zeros((B, H), jnp.float32)
            last_layer = (l == L - 1)

            # Fully unrolled time recurrence (S small & static).  Per step the
            # critical path is: dot(h, W_hh) -> +gx[t] -> sigmoid/tanh (full
            # 128-lane slab, 2 EUP pushes) -> where/slices -> c,h update.
            for t in range(S):
                g = gx[t * B:(t + 1) * B, :] + jnp.dot(
                    h, whh, preferred_element_type=jnp.float32)   # (B, 4H)
                sig = jax.nn.sigmoid(g)
                tnh = jnp.tanh(g)
                act = jnp.where(g_mask, tnh, sig)      # i,f,o: sigmoid; g: tanh
                i_g = act[:, 0:H]
                f_g = act[:, H:2 * H]
                g_g = act[:, 2 * H:3 * H]
                o_g = act[:, 3 * H:4 * H]
                c = f_g * c + i_g * g_g
                h = o_g * jnp.tanh(c)
                if not last_layer:
                    # Off the critical path: contiguous static 2-row store; the
                    # next layer's input is read back in ONE load (no concat).
                    hseq_ref[t * B:(t + 1) * B, :] = h

            hn_rows.append(h)                          # final h of layer (B, H)
            if not last_layer:
                xin = hseq_ref[...]                    # (S*B, H), time-major

        # hn.view(-1, hidden_size): rows ordered (layer, batch) = l*B + b.
        hn = jnp.concatenate(hn_rows, axis=0)          # (L*B, H)

        # Fused head: relu -> Linear(H,128) -> relu -> Linear(128, C_pad).
        z = jnp.maximum(hn, 0.0)
        z = (jnp.dot(z, w1_ref[...].astype(jnp.float32),
                     preferred_element_type=jnp.float32) + b1_ref[...])
        z = jnp.maximum(z, 0.0)
        # Lane-dense (C padded to 128) store: unmasked vst + aligned writeback.
        out_ref[...] = (jnp.dot(z, w2_ref[...],
                                preferred_element_type=jnp.float32)
                        + b2_ref[...])

    return kernel


# ----------------------------------------------------------------------------
# Wrapper
# ----------------------------------------------------------------------------
@functools.partial(jax.jit, static_argnames=("num_layers", "hidden_size"))
def lstm1_forward(x, params, *, num_layers, hidden_size):
    """x: (B, S, D) batch-first, like the PyTorch module. Returns (L*B, C)."""
    B, S, D = x.shape
    C = params["w2_t"].shape[1]
    C_pad = 128 * ((C + 127) // 128)

    # Layout plumbing (not compute): time-major flat input, rows t*B + b.
    x_tm = jnp.transpose(x, (1, 0, 2)).reshape(S * B, D)

    # Lane-dense head: pad last Linear to a 128-wide output slab with zeros.
    w2p = jnp.pad(params["w2_t"], ((0, 0), (0, C_pad - C)))
    b2p = jnp.pad(params["b2"], ((0, 0), (0, C_pad - C)))

    kernel = build_fused_kernel(num_layers, B, S, hidden_size)

    args = [x_tm]
    for l in range(num_layers):
        args += [params[f"w_ih_t_{l}"], params[f"w_hh_t_{l}"], params[f"b_{l}"]]
    args += [params["w1_t"], params["b1"], w2p, b2p]

    # No grid: single invocation, all operands DMA'd whole into VMEM.
    out_pad = pl.pallas_call(
        kernel,
        out_shape=jax.ShapeDtypeStruct((num_layers * B, C_pad), jnp.float32),
        scratch_shapes=[pltpu.VMEM((S * B, hidden_size), jnp.float32)],
    )(*args)
    return out_pad[:, :C]


# ----------------------------------------------------------------------------
# Pure-JAX reference (for correctness check; uses the same bf16-rounded weights)
# ----------------------------------------------------------------------------
def reference_forward(x, params, num_layers, hidden_size):
    B = x.shape[0]
    layer_in = x  # (B, S, D)
    hn_list = []
    for l in range(num_layers):
        w_ih_t = params[f"w_ih_t_{l}"].astype(jnp.float32)
        w_hh_t = params[f"w_hh_t_{l}"].astype(jnp.float32)
        b = params[f"b_{l}"]
        H = hidden_size

        def step(carry, x_t):
            h, c = carry
            g = x_t @ w_ih_t + h @ w_hh_t + b
            i = jax.nn.sigmoid(g[:, 0:H])
            f = jax.nn.sigmoid(g[:, H:2 * H])
            gg = jnp.tanh(g[:, 2 * H:3 * H])
            o = jax.nn.sigmoid(g[:, 3 * H:4 * H])
            c = f * c + i * gg
            h = o * jnp.tanh(c)
            return (h, c), h

        h0 = jnp.zeros((B, H), jnp.float32)
        c0 = jnp.zeros((B, H), jnp.float32)
        (h_fin, _), hs = jax.lax.scan(
            step, (h0, c0), jnp.transpose(layer_in, (1, 0, 2)))
        hn_list.append(h_fin)
        layer_in = jnp.transpose(hs, (1, 0, 2))
    hn = jnp.concatenate(hn_list, axis=0)
    z = jnp.maximum(hn, 0.0) @ params["w1_t"].astype(jnp.float32) + params["b1"]
    z = jnp.maximum(z, 0.0)
    return z @ params["w2_t"] + params["b2"]


# ----------------------------------------------------------------------------
# Parameter construction (deterministic, synthetic, PyTorch-style layout).
# The big matmul weights are stored bf16 (halved HBM->VMEM startup DMA);
# biases and the tiny final Linear stay f32.
# ----------------------------------------------------------------------------
def make_params(key, input_size, hidden_size, num_layers, num_classes):
    params = {}
    k = 1.0 / jnp.sqrt(hidden_size)
    keys = jax.random.split(key, 4 * num_layers + 4)
    ki = 0
    for l in range(num_layers):
        in_dim = input_size if l == 0 else hidden_size
        params[f"w_ih_t_{l}"] = jax.random.uniform(
            keys[ki], (in_dim, 4 * hidden_size), jnp.float32, -k, k
        ).astype(jnp.bfloat16); ki += 1
        params[f"w_hh_t_{l}"] = jax.random.uniform(
            keys[ki], (hidden_size, 4 * hidden_size), jnp.float32, -k, k
        ).astype(jnp.bfloat16); ki += 1
        b_ih = jax.random.uniform(
            keys[ki], (4 * hidden_size,), jnp.float32, -k, k); ki += 1
        b_hh = jax.random.uniform(
            keys[ki], (4 * hidden_size,), jnp.float32, -k, k); ki += 1
        params[f"b_{l}"] = (b_ih + b_hh).reshape(1, 4 * hidden_size)
    # fc_1: hidden_size -> 128
    k1 = 1.0 / jnp.sqrt(hidden_size)
    params["w1_t"] = jax.random.uniform(
        keys[ki], (hidden_size, 128), jnp.float32, -k1, k1
    ).astype(jnp.bfloat16); ki += 1
    params["b1"] = jax.random.uniform(keys[ki], (1, 128), jnp.float32, -k1, k1); ki += 1
    # fc: 128 -> num_classes
    k2 = 1.0 / jnp.sqrt(128.0)
    params["w2_t"] = jax.random.uniform(
        keys[ki], (128, num_classes), jnp.float32, -k2, k2); ki += 1
    params["b2"] = jax.random.uniform(
        keys[ki], (1, num_classes), jnp.float32, -k2, k2); ki += 1
    return params


if __name__ == "__main__":
    batch = 2
    seq_length = 8
    input_size = 16
    hidden_size = 32
    num_layers = 2
    num_classes = 5

    key = jax.random.PRNGKey(0)
    k_x, k_p = jax.random.split(key)
    x = jax.random.normal(k_x, (batch, seq_length, input_size), jnp.float32)
    params = make_params(k_p, input_size, hidden_size, num_layers, num_classes)

    out = lstm1_forward(x, params, num_layers=num_layers, hidden_size=hidden_size)
    out = jax.block_until_ready(out)

    ref = reference_forward(x, params, num_layers, hidden_size)
    assert out.shape == (num_layers * batch, num_classes), out.shape
    assert jnp.allclose(out, ref, atol=1e-4, rtol=1e-4), (
        f"max abs err {jnp.max(jnp.abs(out - ref))}")

    print("KERNEL_OK")
</pallas_src>

<mosaic_0001>
module attributes {stable_mosaic.version = 11 : i64} {
  func.func @kernel(%arg0: memref<16x16xf32, #tpu.memory_space<vmem>>, %arg1: memref<16x128xbf16, #tpu.memory_space<vmem>>, %arg2: memref<32x128xbf16, #tpu.memory_space<vmem>>, %arg3: memref<1x128xf32, #tpu.memory_space<vmem>>, %arg4: memref<32x128xbf16, #tpu.memory_space<vmem>>, %arg5: memref<32x128xbf16, #tpu.memory_space<vmem>>, %arg6: memref<1x128xf32, #tpu.memory_space<vmem>>, %arg7: memref<32x128xbf16, #tpu.memory_space<vmem>>, %arg8: memref<1x128xf32, #tpu.memory_space<vmem>>, %arg9: memref<128x128xf32, #tpu.memory_space<vmem>>, %arg10: memref<1x128xf32, #tpu.memory_space<vmem>>, %arg11: memref<4x128xf32, #tpu.memory_space<vmem>>, %arg12: memref<16x32xf32, #tpu.memory_space<vmem>>) attributes {dimension_semantics = [], scalar_prefetch = 0 : i64, scratch_operands = 1 : i64, tpu.core_type = #tpu.core_type<tc>} {
    %0 = tpu.iota {dimensions = array<i32: 1>} : vector<2x128xi32>
    %c64_i32 = arith.constant 64 : i32
    %1 = vector.broadcast %c64_i32 : i32 to vector<2x128xi32>
    %2 = arith.cmpi sge, %0, %1 : vector<2x128xi32>
    %c96_i32 = arith.constant 96 : i32
    %3 = vector.broadcast %c96_i32 : i32 to vector<2x128xi32>
    %4 = arith.cmpi slt, %0, %3 : vector<2x128xi32>
    %5 = arith.andi %2, %4 : vector<2x128xi1>
    %c0 = arith.constant 0 : index
    %c0_0 = arith.constant 0 : index
    %6 = vector.load %arg0[%c0, %c0_0] : memref<16x16xf32, #tpu.memory_space<vmem>>, vector<16x16xf32>
    %c0_1 = arith.constant 0 : index
    %c0_2 = arith.constant 0 : index
    %7 = vector.load %arg1[%c0_1, %c0_2] : memref<16x128xbf16, #tpu.memory_space<vmem>>, vector<16x128xbf16>
    %8 = arith.extf %7 : vector<16x128xbf16> to vector<16x128xf32>
    %c0_3 = arith.constant 0 : index
    %c0_4 = arith.constant 0 : index
    %9 = vector.load %arg2[%c0_3, %c0_4] : memref<32x128xbf16, #tpu.memory_space<vmem>>, vector<32x128xbf16>
    %10 = arith.extf %9 : vector<32x128xbf16> to vector<32x128xf32>
    %c0_5 = arith.constant 0 : index
    %c0_6 = arith.constant 0 : index
    %11 = vector.load %arg3[%c0_5, %c0_6] : memref<1x128xf32, #tpu.memory_space<vmem>>, vector<1x128xf32>
    %cst = arith.constant dense<0.000000e+00> : vector<16x128xf32>
    %12 = tpu.matmul %6, %8, %cst {dimension_numbers = #tpu.dot_dimension_numbers<[1], [0], [0], [1], [0, 0, 1, 1], [], []>} : vector<16x16xf32>, vector<16x128xf32>, vector<16x128xf32> -> vector<16x128xf32>
    %13 = vector.broadcast %11 : vector<1x128xf32> to vector<16x128xf32>
    %14 = arith.addf %12, %13 : vector<16x128xf32>
    %cst_7 = arith.constant 0.000000e+00 : f32
    %15 = vector.broadcast %cst_7 : f32 to vector<2x32xf32>
    %cst_8 = arith.constant 0.000000e+00 : f32
    %16 = vector.broadcast %cst_8 : f32 to vector<2x32xf32>
    %17 = vector.extract_strided_slice %14 {offsets = [0, 0], sizes = [2, 128], strides = [1, 1]} : vector<16x128xf32> to vector<2x128xf32>
    %cst_9 = arith.constant dense<0.000000e+00> : vector<2x128xf32>
    %18 = tpu.matmul %15, %10, %cst_9 {dimension_numbers = #tpu.dot_dimension_numbers<[1], [0], [0], [1], [0, 0, 1, 1], [], []>} : vector<2x32xf32>, vector<32x128xf32>, vector<2x128xf32> -> vector<2x128xf32>
    %19 = arith.addf %17, %18 : vector<2x128xf32>
    %20 = arith.negf %19 : vector<2x128xf32>
    %21 = math.exp %20 : vector<2x128xf32>
    %cst_10 = arith.constant 1.000000e+00 : f32
    %22 = vector.broadcast %cst_10 : f32 to vector<2x128xf32>
    %23 = arith.addf %22, %21 : vector<2x128xf32>
    %24 = arith.divf %22, %23 : vector<2x128xf32>
    %25 = math.tanh %19 : vector<2x128xf32>
    %26 = arith.select %5, %25, %24 : vector<2x128xi1>, vector<2x128xf32>
    %27 = vector.extract_strided_slice %26 {offsets = [0, 0], sizes = [2, 32], strides = [1, 1]} : vector<2x128xf32> to vector<2x32xf32>
    %28 = vector.extract_strided_slice %26 {offsets = [0, 32], sizes = [2, 32], strides = [1, 1]} : vector<2x128xf32> to vector<2x32xf32>
    %29 = vector.extract_strided_slice %26 {offsets = [0, 64], sizes = [2, 32], strides = [1, 1]} : vector<2x128xf32> to vector<2x32xf32>
    %30 = vector.extract_strided_slice %26 {offsets = [0, 96], sizes = [2, 32], strides = [1, 1]} : vector<2x128xf32> to vector<2x32xf32>
    %31 = arith.mulf %28, %16 : vector<2x32xf32>
    %32 = arith.mulf %27, %29 : vector<2x32xf32>
    %33 = arith.addf %31, %32 : vector<2x32xf32>
    %34 = math.tanh %33 : vector<2x32xf32>
    %35 = arith.mulf %30, %34 : vector<2x32xf32>
    %c0_11 = arith.constant 0 : index
    %c0_12 = arith.constant 0 : index
    %36 = vector.load %arg12[%c0_11, %c0_12] : memref<16x32xf32, #tpu.memory_space<vmem>>, vector<2x32xf32>
    tpu.vector_store %arg12[%c0_11, %c0_12], %35 {strides = array<i32>} : memref<16x32xf32, #tpu.memory_space<vmem>>, vector<2x32xf32>,
    %37 = vector.extract_strided_slice %14 {offsets = [2, 0], sizes = [2, 128], strides = [1, 1]} : vector<16x128xf32> to vector<2x128xf32>
    %cst_13 = arith.constant dense<0.000000e+00> : vector<2x128xf32>
    %38 = tpu.matmul %35, %10, %cst_13 {dimension_numbers = #tpu.dot_dimension_numbers<[1], [0], [0], [1], [0, 0, 1, 1], [], []>} : vector<2x32xf32>, vector<32x128xf32>, vector<2x128xf32> -> vector<2x128xf32>
    %39 = arith.addf %37, %38 : vector<2x128xf32>
    %40 = arith.negf %39 : vector<2x128xf32>
    %41 = math.exp %40 : vector<2x128xf32>
    %cst_14 = arith.constant 1.000000e+00 : f32
    %42 = vector.broadcast %cst_14 : f32 to vector<2x128xf32>
    %43 = arith.addf %42, %41 : vector<2x128xf32>
    %44 = arith.divf %42, %43 : vector<2x128xf32>
    %45 = math.tanh %39 : vector<2x128xf32>
    %46 = arith.select %5, %45, %44 : vector<2x128xi1>, vector<2x128xf32>
    %47 = vector.extract_strided_slice %46 {offsets = [0, 0], sizes = [2, 32], strides = [1, 1]} : vector<2x128xf32> to vector<2x32xf32>
    %48 = vector.extract_strided_slice %46 {offsets = [0, 32], sizes = [2, 32], strides = [1, 1]} : vector<2x128xf32> to vector<2x32xf32>
    %49 = vector.extract_strided_slice %46 {offsets = [0, 64], sizes = [2, 32], strides = [1, 1]} : vector<2x128xf32> to vector<2x32xf32>
    %50 = vector.extract_strided_slice %46 {offsets = [0, 96], sizes = [2, 32], strides = [1, 1]} : vector<2x128xf32> to vector<2x32xf32>
    %51 = arith.mulf %48, %33 : vector<2x32xf32>
    %52 = arith.mulf %47, %49 : vector<2x32xf32>
    %53 = arith.addf %51, %52 : vector<2x32xf32>
    %54 = math.tanh %53 : vector<2x32xf32>
    %55 = arith.mulf %50, %54 : vector<2x32xf32>
    %c2 = arith.constant 2 : index
    %c0_15 = arith.constant 0 : index
    %56 = vector.load %arg12[%c2, %c0_15] : memref<16x32xf32, #tpu.memory_space<vmem>>, vector<2x32xf32>
    tpu.vector_store %arg12[%c2, %c0_15], %55 {strides = array<i32>} : memref<16x32xf32, #tpu.memory_space<vmem>>, vector<2x32xf32>,
    %57 = vector.extract_strided_slice %14 {offsets = [4, 0], sizes = [2, 128], strides = [1, 1]} : vector<16x128xf32> to vector<2x128xf32>
    %cst_16 = arith.constant dense<0.000000e+00> : vector<2x128xf32>
    %58 = tpu.matmul %55, %10, %cst_16 {dimension_numbers = #tpu.dot_dimension_numbers<[1], [0], [0], [1], [0, 0, 1, 1], [], []>} : vector<2x32xf32>, vector<32x128xf32>, vector<2x128xf32> -> vector<2x128xf32>
    %59 = arith.addf %57, %58 : vector<2x128xf32>
    %60 = arith.negf %59 : vector<2x128xf32>
    %61 = math.exp %60 : vector<2x128xf32>
    %cst_17 = arith.constant 1.000000e+00 : f32
    %62 = vector.broadcast %cst_17 : f32 to vector<2x128xf32>
    %63 = arith.addf %62, %61 : vector<2x128xf32>
    %64 = arith.divf %62, %63 : vector<2x128xf32>
    %65 = math.tanh %59 : vector<2x128xf32>
    %66 = arith.select %5, %65, %64 : vector<2x128xi1>, vector<2x128xf32>
    %67 = vector.extract_strided_slice %66 {offsets = [0, 0], sizes = [2, 32], strides = [1, 1]} : vector<2x128xf32> to vector<2x32xf32>
    %68 = vector.extract_strided_slice %66 {offsets = [0, 32], sizes = [2, 32], strides = [1, 1]} : vector<2x128xf32> to vector<2x32xf32>
    %69 = vector.extract_strided_slice %66 {offsets = [0, 64], sizes = [2, 32], strides = [1, 1]} : vector<2x128xf32> to vector<2x32xf32>
    %70 = vector.extract_strided_slice %66 {offsets = [0, 96], sizes = [2, 32], strides = [1, 1]} : vector<2x128xf32> to vector<2x32xf32>
    %71 = arith.mulf %68, %53 : vector<2x32xf32>
    %72 = arith.mulf %67, %69 : vector<2x32xf32>
    %73 = arith.addf %71, %72 : vector<2x32xf32>
    %74 = math.tanh %73 : vector<2x32xf32>
    %75 = arith.mulf %70, %74 : vector<2x32xf32>
    %c4 = arith.constant 4 : index
    %c0_18 = arith.constant 0 : index
    %76 = vector.load %arg12[%c4, %c0_18] : memref<16x32xf32, #tpu.memory_space<vmem>>, vector<2x32xf32>
    tpu.vector_store %arg12[%c4, %c0_18], %75 {strides = array<i32>} : memref<16x32xf32, #tpu.memory_space<vmem>>, vector<2x32xf32>,
    %77 = vector.extract_strided_slice %14 {offsets = [6, 0], sizes = [2, 128], strides = [1, 1]} : vector<16x128xf32> to vector<2x128xf32>
    %cst_19 = arith.constant dense<0.000000e+00> : vector<2x128xf32>
    %78 = tpu.matmul %75, %10, %cst_19 {dimension_numbers = #tpu.dot_dimension_numbers<[1], [0], [0], [1], [0, 0, 1, 1], [], []>} : vector<2x32xf32>, vector<32x128xf32>, vector<2x128xf32> -> vector<2x128xf32>
    %79 = arith.addf %77, %78 : vector<2x128xf32>
    %80 = arith.negf %79 : vector<2x128xf32>
    %81 = math.exp %80 : vector<2x128xf32>
    %cst_20 = arith.constant 1.000000e+00 : f32
    %82 = vector.broadcast %cst_20 : f32 to vector<2x128xf32>
    %83 = arith.addf %82, %81 : vector<2x128xf32>
    %84 = arith.divf %82, %83 : vector<2x128xf32>
    %85 = math.tanh %79 : vector<2x128xf32>
    %86 = arith.select %5, %85, %84 : vector<2x128xi1>, vector<2x128xf32>
    %87 = vector.extract_strided_slice %86 {offsets = [0, 0], sizes = [2, 32], strides = [1, 1]} : vector<2x128xf32> to vector<2x32xf32>
    %88 = vector.extract_strided_slice %86 {offsets = [0, 32], sizes = [2, 32], strides = [1, 1]} : vector<2x128xf32> to vector<2x32xf32>
    %89 = vector.extract_strided_slice %86 {offsets = [0, 64], sizes = [2, 32], strides = [1, 1]} : vector<2x128xf32> to vector<2x32xf32>
    %90 = vector.extract_strided_slice %86 {offsets = [0, 96], sizes = [2, 32], strides = [1, 1]} : vector<2x128xf32> to vector<2x32xf32>
    %91 = arith.mulf %88, %73 : vector<2x32xf32>
    %92 = arith.mulf %87, %89 : vector<2x32xf32>
    %93 = arith.addf %91, %92 : vector<2x32xf32>
    %94 = math.tanh %93 : vector<2x32xf32>
    %95 = arith.mulf %90, %94 : vector<2x32xf32>
    %c6 = arith.constant 6 : index
    %c0_21 = arith.constant 0 : index
    %96 = vector.load %arg12[%c6, %c0_21] : memref<16x32xf32, #tpu.memory_space<vmem>>, vector<2x32xf32>
    tpu.vector_store %arg12[%c6, %c0_21], %95 {strides = array<i32>} : memref<16x32xf32, #tpu.memory_space<vmem>>, vector<2x32xf32>,
    %97 = vector.extract_strided_slice %14 {offsets = [8, 0], sizes = [2, 128], strides = [1, 1]} : vector<16x128xf32> to vector<2x128xf32>
    %cst_22 = arith.constant dense<0.000000e+00> : vector<2x128xf32>
    %98 = tpu.matmul %95, %10, %cst_22 {dimension_numbers = #tpu.dot_dimension_numbers<[1], [0], [0], [1], [0, 0, 1, 1], [], []>} : vector<2x32xf32>, vector<32x128xf32>, vector<2x128xf32> -> vector<2x128xf32>
    %99 = arith.addf %97, %98 : vector<2x128xf32>
    %100 = arith.negf %99 : vector<2x128xf32>
    %101 = math.exp %100 : vector<2x128xf32>
    %cst_23 = arith.constant 1.000000e+00 : f32
    %102 = vector.broadcast %cst_23 : f32 to vector<2x128xf32>
    %103 = arith.addf %102, %101 : vector<2x128xf32>
    %104 = arith.divf %102, %103 : vector<2x128xf32>
    %105 = math.tanh %99 : vector<2x128xf32>
    %106 = arith.select %5, %105, %104 : vector<2x128xi1>, vector<2x128xf32>
    %107 = vector.extract_strided_slice %106 {offsets = [0, 0], sizes = [2, 32], strides = [1, 1]} : vector<2x128xf32> to vector<2x32xf32>
    %108 = vector.extract_strided_slice %106 {offsets = [0, 32], sizes = [2, 32], strides = [1, 1]} : vector<2x128xf32> to vector<2x32xf32>
    %109 = vector.extract_strided_slice %106 {offsets = [0, 64], sizes = [2, 32], strides = [1, 1]} : vector<2x128xf32> to vector<2x32xf32>
    %110 = vector.extract_strided_slice %106 {offsets = [0, 96], sizes = [2, 32], strides = [1, 1]} : vector<2x128xf32> to vector<2x32xf32>
    %111 = arith.mulf %108, %93 : vector<2x32xf32>
    %112 = arith.mulf %107, %109 : vector<2x32xf32>
    %113 = arith.addf %111, %112 : vector<2x32xf32>
    %114 = math.tanh %113 : vector<2x32xf32>
    %115 = arith.mulf %110, %114 : vector<2x32xf32>
    %c8 = arith.constant 8 : index
    %c0_24 = arith.constant 0 : index
    %116 = vector.load %arg12[%c8, %c0_24] : memref<16x32xf32, #tpu.memory_space<vmem>>, vector<2x32xf32>
    tpu.vector_store %arg12[%c8, %c0_24], %115 {strides = array<i32>} : memref<16x32xf32, #tpu.memory_space<vmem>>, vector<2x32xf32>,
    %117 = vector.extract_strided_slice %14 {offsets = [10, 0], sizes = [2, 128], strides = [1, 1]} : vector<16x128xf32> to vector<2x128xf32>
    %cst_25 = arith.constant dense<0.000000e+00> : vector<2x128xf32>
    %118 = tpu.matmul %115, %10, %cst_25 {dimension_numbers = #tpu.dot_dimension_numbers<[1], [0], [0], [1], [0, 0, 1, 1], [], []>} : vector<2x32xf32>, vector<32x128xf32>, vector<2x128xf32> -> vector<2x128xf32>
    %119 = arith.addf %117, %118 : vector<2x128xf32>
    %120 = arith.negf %119 : vector<2x128xf32>
    %121 = math.exp %120 : vector<2x128xf32>
    %cst_26 = arith.constant 1.000000e+00 : f32
    %122 = vector.broadcast %cst_26 : f32 to vector<2x128xf32>
    %123 = arith.addf %122, %121 : vector<2x128xf32>
    %124 = arith.divf %122, %123 : vector<2x128xf32>
    %125 = math.tanh %119 : vector<2x128xf32>
    %126 = arith.select %5, %125, %124 : vector<2x128xi1>, vector<2x128xf32>
    %127 = vector.extract_strided_slice %126 {offsets = [0, 0], sizes = [2, 32], strides = [1, 1]} : vector<2x128xf32> to vector<2x32xf32>
    %128 = vector.extract_strided_slice %126 {offsets = [0, 32], sizes = [2, 32], strides = [1, 1]} : vector<2x128xf32> to vector<2x32xf32>
    %129 = vector.extract_strided_slice %126 {offsets = [0, 64], sizes = [2, 32], strides = [1, 1]} : vector<2x128xf32> to vector<2x32xf32>
    %130 = vector.extract_strided_slice %126 {offsets = [0, 96], sizes = [2, 32], strides = [1, 1]} : vector<2x128xf32> to vector<2x32xf32>
    %131 = arith.mulf %128, %113 : vector<2x32xf32>
    %132 = arith.mulf %127, %129 : vector<2x32xf32>
    %133 = arith.addf %131, %132 : vector<2x32xf32>
    %134 = math.tanh %133 : vector<2x32xf32>
    %135 = arith.mulf %130, %134 : vector<2x32xf32>
    %c10 = arith.constant 10 : index
    %c0_27 = arith.constant 0 : index
    %136 = vector.load %arg12[%c10, %c0_27] : memref<16x32xf32, #tpu.memory_space<vmem>>, vector<2x32xf32>
    tpu.vector_store %arg12[%c10, %c0_27], %135 {strides = array<i32>} : memref<16x32xf32, #tpu.memory_space<vmem>>, vector<2x32xf32>,
    %137 = vector.extract_strided_slice %14 {offsets = [12, 0], sizes = [2, 128], strides = [1, 1]} : vector<16x128xf32> to vector<2x128xf32>
    %cst_28 = arith.constant dense<0.000000e+00> : vector<2x128xf32>
    %138 = tpu.matmul %135, %10, %cst_28 {dimension_numbers = #tpu.dot_dimension_numbers<[1], [0], [0], [1], [0, 0, 1, 1], [], []>} : vector<2x32xf32>, vector<32x128xf32>, vector<2x128xf32> -> vector<2x128xf32>
    %139 = arith.addf %137, %138 : vector<2x128xf32>
    %140 = arith.negf %139 : vector<2x128xf32>
    %141 = math.exp %140 : vector<2x128xf32>
    %cst_29 = arith.constant 1.000000e+00 : f32
    %142 = vector.broadcast %cst_29 : f32 to vector<2x128xf32>
    %143 = arith.addf %142, %141 : vector<2x128xf32>
    %144 = arith.divf %142, %143 : vector<2x128xf32>
    %145 = math.tanh %139 : vector<2x128xf32>
    %146 = arith.select %5, %145, %144 : vector<2x128xi1>, vector<2x128xf32>
    %147 = vector.extract_strided_slice %146 {offsets = [0, 0], sizes = [2, 32], strides = [1, 1]} : vector<2x128xf32> to vector<2x32xf32>
    %148 = vector.extract_strided_slice %146 {offsets = [0, 32], sizes = [2, 32], strides = [1, 1]} : vector<2x128xf32> to vector<2x32xf32>
    %149 = vector.extract_strided_slice %146 {offsets = [0, 64], sizes = [2, 32], strides = [1, 1]} : vector<2x128xf32> to vector<2x32xf32>
    %150 = vector.extract_strided_slice %146 {offsets = [0, 96], sizes = [2, 32], strides = [1, 1]} : vector<2x128xf32> to vector<2x32xf32>
    %151 = arith.mulf %148, %133 : vector<2x32xf32>
    %152 = arith.mulf %147, %149 : vector<2x32xf32>
    %153 = arith.addf %151, %152 : vector<2x32xf32>
    %154 = math.tanh %153 : vector<2x32xf32>
    %155 = arith.mulf %150, %154 : vector<2x32xf32>
    %c12 = arith.constant 12 : index
    %c0_30 = arith.constant 0 : index
    %156 = vector.load %arg12[%c12, %c0_30] : memref<16x32xf32, #tpu.memory_space<vmem>>, vector<2x32xf32>
    tpu.vector_store %arg12[%c12, %c0_30], %155 {strides = array<i32>} : memref<16x32xf32, #tpu.memory_space<vmem>>, vector<2x32xf32>,
    %157 = vector.extract_strided_slice %14 {offsets = [14, 0], sizes = [2, 128], strides = [1, 1]} : vector<16x128xf32> to vector<2x128xf32>
    %cst_31 = arith.constant dense<0.000000e+00> : vector<2x128xf32>
    %158 = tpu.matmul %155, %10, %cst_31 {dimension_numbers = #tpu.dot_dimension_numbers<[1], [0], [0], [1], [0, 0, 1, 1], [], []>} : vector<2x32xf32>, vector<32x128xf32>, vector<2x128xf32> -> vector<2x128xf32>
    %159 = arith.addf %157, %158 : vector<2x128xf32>
    %160 = arith.negf %159 : vector<2x128xf32>
    %161 = math.exp %160 : vector<2x128xf32>
    %cst_32 = arith.constant 1.000000e+00 : f32
    %162 = vector.broadcast %cst_32 : f32 to vector<2x128xf32>
    %163 = arith.addf %162, %161 : vector<2x128xf32>
    %164 = arith.divf %162, %163 : vector<2x128xf32>
    %165 = math.tanh %159 : vector<2x128xf32>
    %166 = arith.select %5, %165, %164 : vector<2x128xi1>, vector<2x128xf32>
    %167 = vector.extract_strided_slice %166 {offsets = [0, 0], sizes = [2, 32], strides = [1, 1]} : vector<2x128xf32> to vector<2x32xf32>
    %168 = vector.extract_strided_slice %166 {offsets = [0, 32], sizes = [2, 32], strides = [1, 1]} : vector<2x128xf32> to vector<2x32xf32>
    %169 = vector.extract_strided_slice %166 {offsets = [0, 64], sizes = [2, 32], strides = [1, 1]} : vector<2x128xf32> to vector<2x32xf32>
    %170 = vector.extract_strided_slice %166 {offsets = [0, 96], sizes = [2, 32], strides = [1, 1]} : vector<2x128xf32> to vector<2x32xf32>
    %171 = arith.mulf %168, %153 : vector<2x32xf32>
    %172 = arith.mulf %167, %169 : vector<2x32xf32>
    %173 = arith.addf %171, %172 : vector<2x32xf32>
    %174 = math.tanh %173 : vector<2x32xf32>
    %175 = arith.mulf %170, %174 : vector<2x32xf32>
    %c14 = arith.constant 14 : index
    %c0_33 = arith.constant 0 : index
    %176 = vector.load %arg12[%c14, %c0_33] : memref<16x32xf32, #tpu.memory_space<vmem>>, vector<2x32xf32>
    tpu.vector_store %arg12[%c14, %c0_33], %175 {strides = array<i32>} : memref<16x32xf32, #tpu.memory_space<vmem>>, vector<2x32xf32>,
    %c0_34 = arith.constant 0 : index
    %c0_35 = arith.constant 0 : index
    %177 = vector.load %arg12[%c0_34, %c0_35] : memref<16x32xf32, #tpu.memory_space<vmem>>, vector<16x32xf32>
    %c0_36 = arith.constant 0 : index
    %c0_37 = arith.constant 0 : index
    %178 = vector.load %arg4[%c0_36, %c0_37] : memref<32x128xbf16, #tpu.memory_space<vmem>>, vector<32x128xbf16>
    %179 = arith.extf %178 : vector<32x128xbf16> to vector<32x128xf32>
    %c0_38 = arith.constant 0 : index
    %c0_39 = arith.constant 0 : index
    %180 = vector.load %arg5[%c0_38, %c0_39] : memref<32x128xbf16, #tpu.memory_space<vmem>>, vector<32x128xbf16>
    %181 = arith.extf %180 : vector<32x128xbf16> to vector<32x128xf32>
    %c0_40 = arith.constant 0 : index
    %c0_41 = arith.constant 0 : index
    %182 = vector.load %arg6[%c0_40, %c0_41] : memref<1x128xf32, #tpu.memory_space<vmem>>, vector<1x128xf32>
    %cst_42 = arith.constant dense<0.000000e+00> : vector<16x128xf32>
    %183 = tpu.matmul %177, %179, %cst_42 {dimension_numbers = #tpu.dot_dimension_numbers<[1], [0], [0], [1], [0, 0, 1, 1], [], []>} : vector<16x32xf32>, vector<32x128xf32>, vector<16x128xf32> -> vector<16x128xf32>
    %184 = vector.broadcast %182 : vector<1x128xf32> to vector<16x128xf32>
    %185 = arith.addf %183, %184 : vector<16x128xf32>
    %cst_43 = arith.constant 0.000000e+00 : f32
    %186 = vector.broadcast %cst_43 : f32 to vector<2x32xf32>
    %cst_44 = arith.constant 0.000000e+00 : f32
    %187 = vector.broadcast %cst_44 : f32 to vector<2x32xf32>
    %188 = vector.extract_strided_slice %185 {offsets = [0, 0], sizes = [2, 128], strides = [1, 1]} : vector<16x128xf32> to vector<2x128xf32>
    %cst_45 = arith.constant dense<0.000000e+00> : vector<2x128xf32>
    %189 = tpu.matmul %186, %181, %cst_45 {dimension_numbers = #tpu.dot_dimension_numbers<[1], [0], [0], [1], [0, 0, 1, 1], [], []>} : vector<2x32xf32>, vector<32x128xf32>, vector<2x128xf32> -> vector<2x128xf32>
    %190 = arith.addf %188, %189 : vector<2x128xf32>
    %191 = arith.negf %190 : vector<2x128xf32>
    %192 = math.exp %191 : vector<2x128xf32>
    %cst_46 = arith.constant 1.000000e+00 : f32
    %193 = vector.broadcast %cst_46 : f32 to vector<2x128xf32>
    %194 = arith.addf %193, %192 : vector<2x128xf32>
    %195 = arith.divf %193, %194 : vector<2x128xf32>
    %196 = math.tanh %190 : vector<2x128xf32>
    %197 = arith.select %5, %196, %195 : vector<2x128xi1>, vector<2x128xf32>
    %198 = vector.extract_strided_slice %197 {offsets = [0, 0], sizes = [2, 32], strides = [1, 1]} : vector<2x128xf32> to vector<2x32xf32>
    %199 = vector.extract_strided_slice %197 {offsets = [0, 32], sizes = [2, 32], strides = [1, 1]} : vector<2x128xf32> to vector<2x32xf32>
    %200 = vector.extract_strided_slice %197 {offsets = [0, 64], sizes = [2, 32], strides = [1, 1]} : vector<2x128xf32> to vector<2x32xf32>
    %201 = vector.extract_strided_slice %197 {offsets = [0, 96], sizes = [2, 32], strides = [1, 1]} : vector<2x128xf32> to vector<2x32xf32>
    %202 = arith.mulf %199, %187 : vector<2x32xf32>
    %203 = arith.mulf %198, %200 : vector<2x32xf32>
    %204 = arith.addf %202, %203 : vector<2x32xf32>
    %205 = math.tanh %204 : vector<2x32xf32>
    %206 = arith.mulf %201, %205 : vector<2x32xf32>
    %207 = vector.extract_strided_slice %185 {offsets = [2, 0], sizes = [2, 128], strides = [1, 1]} : vector<16x128xf32> to vector<2x128xf32>
    %cst_47 = arith.constant dense<0.000000e+00> : vector<2x128xf32>
    %208 = tpu.matmul %206, %181, %cst_47 {dimension_numbers = #tpu.dot_dimension_numbers<[1], [0], [0], [1], [0, 0, 1, 1], [], []>} : vector<2x32xf32>, vector<32x128xf32>, vector<2x128xf32> -> vector<2x128xf32>
    %209 = arith.addf %207, %208 : vector<2x128xf32>
    %210 = arith.negf %209 : vector<2x128xf32>
    %211 = math.exp %210 : vector<2x128xf32>
    %cst_48 = arith.constant 1.000000e+00 : f32
    %212 = vector.broadcast %cst_48 : f32 to vector<2x128xf32>
    %213 = arith.addf %212, %211 : vector<2x128xf32>
    %214 = arith.divf %212, %213 : vector<2x128xf32>
    %215 = math.tanh %209 : vector<2x128xf32>
    %216 = arith.select %5, %215, %214 : vector<2x128xi1>, vector<2x128xf32>
    %217 = vector.extract_strided_slice %216 {offsets = [0, 0], sizes = [2, 32], strides = [1, 1]} : vector<2x128xf32> to vector<2x32xf32>
    %218 = vector.extract_strided_slice %216 {offsets = [0, 32], sizes = [2, 32], strides = [1, 1]} : vector<2x128xf32> to vector<2x32xf32>
    %219 = vector.extract_strided_slice %216 {offsets = [0, 64], sizes = [2, 32], strides = [1, 1]} : vector<2x128xf32> to vector<2x32xf32>
    %220 = vector.extract_strided_slice %216 {offsets = [0, 96], sizes = [2, 32], strides = [1, 1]} : vector<2x128xf32> to vector<2x32xf32>
    %221 = arith.mulf %218, %204 : vector<2x32xf32>
    %222 = arith.mulf %217, %219 : vector<2x32xf32>
    %223 = arith.addf %221, %222 : vector<2x32xf32>
    %224 = math.tanh %223 : vector<2x32xf32>
    %225 = arith.mulf %220, %224 : vector<2x32xf32>
    %226 = vector.extract_strided_slice %185 {offsets = [4, 0], sizes = [2, 128], strides = [1, 1]} : vector<16x128xf32> to vector<2x128xf32>
    %cst_49 = arith.constant dense<0.000000e+00> : vector<2x128xf32>
    %227 = tpu.matmul %225, %181, %cst_49 {dimension_numbers = #tpu.dot_dimension_numbers<[1], [0], [0], [1], [0, 0, 1, 1], [], []>} : vector<2x32xf32>, vector<32x128xf32>, vector<2x128xf32> -> vector<2x128xf32>
    %228 = arith.addf %226, %227 : vector<2x128xf32>
    %229 = arith.negf %228 : vector<2x128xf32>
    %230 = math.exp %229 : vector<2x128xf32>
    %cst_50 = arith.constant 1.000000e+00 : f32
    %231 = vector.broadcast %cst_50 : f32 to vector<2x128xf32>
    %232 = arith.addf %231, %230 : vector<2x128xf32>
    %233 = arith.divf %231, %232 : vector<2x128xf32>
    %234 = math.tanh %228 : vector<2x128xf32>
    %235 = arith.select %5, %234, %233 : vector<2x128xi1>, vector<2x128xf32>
    %236 = vector.extract_strided_slice %235 {offsets = [0, 0], sizes = [2, 32], strides = [1, 1]} : vector<2x128xf32> to vector<2x32xf32>
    %237 = vector.extract_strided_slice %235 {offsets = [0, 32], sizes = [2, 32], strides = [1, 1]} : vector<2x128xf32> to vector<2x32xf32>
    %238 = vector.extract_strided_slice %235 {offsets = [0, 64], sizes = [2, 32], strides = [1, 1]} : vector<2x128xf32> to vector<2x32xf32>
    %239 = vector.extract_strided_slice %235 {offsets = [0, 96], sizes = [2, 32], strides = [1, 1]} : vector<2x128xf32> to vector<2x32xf32>
    %240 = arith.mulf %237, %223 : vector<2x32xf32>
    %241 = arith.mulf %236, %238 : vector<2x32xf32>
    %242 = arith.addf %240, %241 : vector<2x32xf32>
    %243 = math.tanh %242 : vector<2x32xf32>
    %244 = arith.mulf %239, %243 : vector<2x32xf32>
    %245 = vector.extract_strided_slice %185 {offsets = [6, 0], sizes = [2, 128], strides = [1, 1]} : vector<16x128xf32> to vector<2x128xf32>
    %cst_51 = arith.constant dense<0.000000e+00> : vector<2x128xf32>
    %246 = tpu.matmul %244, %181, %cst_51 {dimension_numbers = #tpu.dot_dimension_numbers<[1], [0], [0], [1], [0, 0, 1, 1], [], []>} : vector<2x32xf32>, vector<32x128xf32>, vector<2x128xf32> -> vector<2x128xf32>
    %247 = arith.addf %245, %246 : vector<2x128xf32>
    %248 = arith.negf %247 : vector<2x128xf32>
    %249 = math.exp %248 : vector<2x128xf32>
    %cst_52 = arith.constant 1.000000e+00 : f32
    %250 = vector.broadcast %cst_52 : f32 to vector<2x128xf32>
    %251 = arith.addf %250, %249 : vector<2x128xf32>
    %252 = arith.divf %250, %251 : vector<2x128xf32>
    %253 = math.tanh %247 : vector<2x128xf32>
    %254 = arith.select %5, %253, %252 : vector<2x128xi1>, vector<2x128xf32>
    %255 = vector.extract_strided_slice %254 {offsets = [0, 0], sizes = [2, 32], strides = [1, 1]} : vector<2x128xf32> to vector<2x32xf32>
    %256 = vector.extract_strided_slice %254 {offsets = [0, 32], sizes = [2, 32], strides = [1, 1]} : vector<2x128xf32> to vector<2x32xf32>
    %257 = vector.extract_strided_slice %254 {offsets = [0, 64], sizes = [2, 32], strides = [1, 1]} : vector<2x128xf32> to vector<2x32xf32>
    %258 = vector.extract_strided_slice %254 {offsets = [0, 96], sizes = [2, 32], strides = [1, 1]} : vector<2x128xf32> to vector<2x32xf32>
    %259 = arith.mulf %256, %242 : vector<2x32xf32>
    %260 = arith.mulf %255, %257 : vector<2x32xf32>
    %261 = arith.addf %259, %260 : vector<2x32xf32>
    %262 = math.tanh %261 : vector<2x32xf32>
    %263 = arith.mulf %258, %262 : vector<2x32xf32>
    %264 = vector.extract_strided_slice %185 {offsets = [8, 0], sizes = [2, 128], strides = [1, 1]} : vector<16x128xf32> to vector<2x128xf32>
    %cst_53 = arith.constant dense<0.000000e+00> : vector<2x128xf32>
    %265 = tpu.matmul %263, %181, %cst_53 {dimension_numbers = #tpu.dot_dimension_numbers<[1], [0], [0], [1], [0, 0, 1, 1], [], []>} : vector<2x32xf32>, vector<32x128xf32>, vector<2x128xf32> -> vector<2x128xf32>
    %266 = arith.addf %264, %265 : vector<2x128xf32>
    %267 = arith.negf %266 : vector<2x128xf32>
    %268 = math.exp %267 : vector<2x128xf32>
    %cst_54 = arith.constant 1.000000e+00 : f32
    %269 = vector.broadcast %cst_54 : f32 to vector<2x128xf32>
    %270 = arith.addf %269, %268 : vector<2x128xf32>
    %271 = arith.divf %269, %270 : vector<2x128xf32>
    %272 = math.tanh %266 : vector<2x128xf32>
    %273 = arith.select %5, %272, %271 : vector<2x128xi1>, vector<2x128xf32>
    %274 = vector.extract_strided_slice %273 {offsets = [0, 0], sizes = [2, 32], strides = [1, 1]} : vector<2x128xf32> to vector<2x32xf32>
    %275 = vector.extract_strided_slice %273 {offsets = [0, 32], sizes = [2, 32], strides = [1, 1]} : vector<2x128xf32> to vector<2x32xf32>
    %276 = vector.extract_strided_slice %273 {offsets = [0, 64], sizes = [2, 32], strides = [1, 1]} : vector<2x128xf32> to vector<2x32xf32>
    %277 = vector.extract_strided_slice %273 {offsets = [0, 96], sizes = [2, 32], strides = [1, 1]} : vector<2x128xf32> to vector<2x32xf32>
    %278 = arith.mulf %275, %261 : vector<2x32xf32>
    %279 = arith.mulf %274, %276 : vector<2x32xf32>
    %280 = arith.addf %278, %279 : vector<2x32xf32>
    %281 = math.tanh %280 : vector<2x32xf32>
    %282 = arith.mulf %277, %281 : vector<2x32xf32>
    %283 = vector.extract_strided_slice %185 {offsets = [10, 0], sizes = [2, 128], strides = [1, 1]} : vector<16x128xf32> to vector<2x128xf32>
    %cst_55 = arith.constant dense<0.000000e+00> : vector<2x128xf32>
    %284 = tpu.matmul %282, %181, %cst_55 {dimension_numbers = #tpu.dot_dimension_numbers<[1], [0], [0], [1], [0, 0, 1, 1], [], []>} : vector<2x32xf32>, vector<32x128xf32>, vector<2x128xf32> -> vector<2x128xf32>
    %285 = arith.addf %283, %284 : vector<2x128xf32>
    %286 = arith.negf %285 : vector<2x128xf32>
    %287 = math.exp %286 : vector<2x128xf32>
    %cst_56 = arith.constant 1.000000e+00 : f32
    %288 = vector.broadcast %cst_56 : f32 to vector<2x128xf32>
    %289 = arith.addf %288, %287 : vector<2x128xf32>
    %290 = arith.divf %288, %289 : vector<2x128xf32>
    %291 = math.tanh %285 : vector<2x128xf32>
    %292 = arith.select %5, %291, %290 : vector<2x128xi1>, vector<2x128xf32>
    %293 = vector.extract_strided_slice %292 {offsets = [0, 0], sizes = [2, 32], strides = [1, 1]} : vector<2x128xf32> to vector<2x32xf32>
    %294 = vector.extract_strided_slice %292 {offsets = [0, 32], sizes = [2, 32], strides = [1, 1]} : vector<2x128xf32> to vector<2x32xf32>
    %295 = vector.extract_strided_slice %292 {offsets = [0, 64], sizes = [2, 32], strides = [1, 1]} : vector<2x128xf32> to vector<2x32xf32>
    %296 = vector.extract_strided_slice %292 {offsets = [0, 96], sizes = [2, 32], strides = [1, 1]} : vector<2x128xf32> to vector<2x32xf32>
    %297 = arith.mulf %294, %280 : vector<2x32xf32>
    %298 = arith.mulf %293, %295 : vector<2x32xf32>
    %299 = arith.addf %297, %298 : vector<2x32xf32>
    %300 = math.tanh %299 : vector<2x32xf32>
    %301 = arith.mulf %296, %300 : vector<2x32xf32>
    %302 = vector.extract_strided_slice %185 {offsets = [12, 0], sizes = [2, 128], strides = [1, 1]} : vector<16x128xf32> to vector<2x128xf32>
    %cst_57 = arith.constant dense<0.000000e+00> : vector<2x128xf32>
    %303 = tpu.matmul %301, %181, %cst_57 {dimension_numbers = #tpu.dot_dimension_numbers<[1], [0], [0], [1], [0, 0, 1, 1], [], []>} : vector<2x32xf32>, vector<32x128xf32>, vector<2x128xf32> -> vector<2x128xf32>
    %304 = arith.addf %302, %303 : vector<2x128xf32>
    %305 = arith.negf %304 : vector<2x128xf32>
    %306 = math.exp %305 : vector<2x128xf32>
    %cst_58 = arith.constant 1.000000e+00 : f32
    %307 = vector.broadcast %cst_58 : f32 to vector<2x128xf32>
    %308 = arith.addf %307, %306 : vector<2x128xf32>
    %309 = arith.divf %307, %308 : vector<2x128xf32>
    %310 = math.tanh %304 : vector<2x128xf32>
    %311 = arith.select %5, %310, %309 : vector<2x128xi1>, vector<2x128xf32>
    %312 = vector.extract_strided_slice %311 {offsets = [0, 0], sizes = [2, 32], strides = [1, 1]} : vector<2x128xf32> to vector<2x32xf32>
    %313 = vector.extract_strided_slice %311 {offsets = [0, 32], sizes = [2, 32], strides = [1, 1]} : vector<2x128xf32> to vector<2x32xf32>
    %314 = vector.extract_strided_slice %311 {offsets = [0, 64], sizes = [2, 32], strides = [1, 1]} : vector<2x128xf32> to vector<2x32xf32>
    %315 = vector.extract_strided_slice %311 {offsets = [0, 96], sizes = [2, 32], strides = [1, 1]} : vector<2x128xf32> to vector<2x32xf32>
    %316 = arith.mulf %313, %299 : vector<2x32xf32>
    %317 = arith.mulf %312, %314 : vector<2x32xf32>
    %318 = arith.addf %316, %317 : vector<2x32xf32>
    %319 = math.tanh %318 : vector<2x32xf32>
    %320 = arith.mulf %315, %319 : vector<2x32xf32>
    %321 = vector.extract_strided_slice %185 {offsets = [14, 0], sizes = [2, 128], strides = [1, 1]} : vector<16x128xf32> to vector<2x128xf32>
    %cst_59 = arith.constant dense<0.000000e+00> : vector<2x128xf32>
    %322 = tpu.matmul %320, %181, %cst_59 {dimension_numbers = #tpu.dot_dimension_numbers<[1], [0], [0], [1], [0, 0, 1, 1], [], []>} : vector<2x32xf32>, vector<32x128xf32>, vector<2x128xf32> -> vector<2x128xf32>
    %323 = arith.addf %321, %322 : vector<2x128xf32>
    %324 = arith.negf %323 : vector<2x128xf32>
    %325 = math.exp %324 : vector<2x128xf32>
    %cst_60 = arith.constant 1.000000e+00 : f32
    %326 = vector.broadcast %cst_60 : f32 to vector<2x128xf32>
    %327 = arith.addf %326, %325 : vector<2x128xf32>
    %328 = arith.divf %326, %327 : vector<2x128xf32>
    %329 = math.tanh %323 : vector<2x128xf32>
    %330 = arith.select %5, %329, %328 : vector<2x128xi1>, vector<2x128xf32>
    %331 = vector.extract_strided_slice %330 {offsets = [0, 0], sizes = [2, 32], strides = [1, 1]} : vector<2x128xf32> to vector<2x32xf32>
    %332 = vector.extract_strided_slice %330 {offsets = [0, 32], sizes = [2, 32], strides = [1, 1]} : vector<2x128xf32> to vector<2x32xf32>
    %333 = vector.extract_strided_slice %330 {offsets = [0, 64], sizes = [2, 32], strides = [1, 1]} : vector<2x128xf32> to vector<2x32xf32>
    %334 = vector.extract_strided_slice %330 {offsets = [0, 96], sizes = [2, 32], strides = [1, 1]} : vector<2x128xf32> to vector<2x32xf32>
    %335 = arith.mulf %332, %318 : vector<2x32xf32>
    %336 = arith.mulf %331, %333 : vector<2x32xf32>
    %337 = arith.addf %335, %336 : vector<2x32xf32>
    %338 = math.tanh %337 : vector<2x32xf32>
    %339 = arith.mulf %334, %338 : vector<2x32xf32>
    %340 = tpu.concatenate %175, %339 in 0 : vector<2x32xf32>, vector<2x32xf32> -> vector<4x32xf32>
    %cst_61 = arith.constant 0.000000e+00 : f32
    %341 = vector.broadcast %cst_61 : f32 to vector<4x32xf32>
    %342 = arith.maximumf %340, %341 : vector<4x32xf32>
    %c0_62 = arith.constant 0 : index
    %c0_63 = arith.constant 0 : index
    %343 = vector.load %arg7[%c0_62, %c0_63] : memref<32x128xbf16, #tpu.memory_space<vmem>>, vector<32x128xbf16>
    %344 = arith.extf %343 : vector<32x128xbf16> to vector<32x128xf32>
    %cst_64 = arith.constant dense<0.000000e+00> : vector<4x128xf32>
    %345 = tpu.matmul %342, %344, %cst_64 {dimension_numbers = #tpu.dot_dimension_numbers<[1], [0], [0], [1], [0, 0, 1, 1], [], []>} : vector<4x32xf32>, vector<32x128xf32>, vector<4x128xf32> -> vector<4x128xf32>
    %c0_65 = arith.constant 0 : index
    %c0_66 = arith.constant 0 : index
    %346 = vector.load %arg8[%c0_65, %c0_66] : memref<1x128xf32, #tpu.memory_space<vmem>>, vector<1x128xf32>
    %347 = vector.broadcast %346 : vector<1x128xf32> to vector<4x128xf32>
    %348 = arith.addf %345, %347 : vector<4x128xf32>
    %cst_67 = arith.constant 0.000000e+00 : f32
    %349 = vector.broadcast %cst_67 : f32 to vector<4x128xf32>
    %350 = arith.maximumf %348, %349 : vector<4x128xf32>
    %c0_68 = arith.constant 0 : index
    %c0_69 = arith.constant 0 : index
    %351 = vector.load %arg9[%c0_68, %c0_69] : memref<128x128xf32, #tpu.memory_space<vmem>>, vector<128x128xf32>
    %cst_70 = arith.constant dense<0.000000e+00> : vector<4x128xf32>
    %352 = tpu.matmul %350, %351, %cst_70 {dimension_numbers = #tpu.dot_dimension_numbers<[1], [0], [0], [1], [0, 0, 1, 1], [], []>} : vector<4x128xf32>, vector<128x128xf32>, vector<4x128xf32> -> vector<4x128xf32>
    %c0_71 = arith.constant 0 : index
    %c0_72 = arith.constant 0 : index
    %353 = vector.load %arg10[%c0_71, %c0_72] : memref<1x128xf32, #tpu.memory_space<vmem>>, vector<1x128xf32>
    %354 = vector.broadcast %353 : vector<1x128xf32> to vector<4x128xf32>
    %355 = arith.addf %352, %354 : vector<4x128xf32>
    %c0_73 = arith.constant 0 : index
    %c0_74 = arith.constant 0 : index
    %356 = vector.load %arg11[%c0_73, %c0_74] : memref<4x128xf32, #tpu.memory_space<vmem>>, vector<4x128xf32>
    tpu.vector_store %arg11[%c0_73, %c0_74], %355 {strides = array<i32>} : memref<4x128xf32, #tpu.memory_space<vmem>>, vector<4x128xf32>,
    return
  }
}

</mosaic_0001>

<llo_original>
// kernel: lstm1_forward.1
$region0: #{lstm1_forward.1}
  #allocation0 [shape = 'u32[]', space=smem, size = 0x4, offset = 0x4, fixed_abs, tag = 'smem constant byte address 0x4 - core index']
  #allocation1 [shape = 'u32[72,128]{1,0:T(1,128)}', space=vmem, size = 0x9000, scoped, tag = 'internal scratch']
  #allocation2 [shape = 'f32[16,32]{1,0:T(8,128)}', space=vmem, size = 0x2000, scoped, tag = 'scratch operand']
  %s0 = inlined_call_operand.vmem [shape: f32[16,16], index: 0, kind: input, shape index: {}]
  %s1 = inlined_call_operand.vmem [shape: bf16[16,128], index: 1, kind: input, shape index: {}]
  %s2 = inlined_call_operand.vmem [shape: bf16[32,128], index: 2, kind: input, shape index: {}]
  %s3 = inlined_call_operand.vmem [shape: f32[1,128], index: 3, kind: input, shape index: {}]
  %s4 = inlined_call_operand.vmem [shape: bf16[32,128], index: 4, kind: input, shape index: {}]
  %s5 = inlined_call_operand.vmem [shape: bf16[32,128], index: 5, kind: input, shape index: {}]
  %s6 = inlined_call_operand.vmem [shape: f32[1,128], index: 6, kind: input, shape index: {}]
  %s7 = inlined_call_operand.vmem [shape: bf16[32,128], index: 7, kind: input, shape index: {}]
  %s8 = inlined_call_operand.vmem [shape: f32[1,128], index: 8, kind: input, shape index: {}]
  %s9 = inlined_call_operand.vmem [shape: f32[128,128], index: 9, kind: input, shape index: {}]
  %s10 = inlined_call_operand.vmem [shape: f32[1,128], index: 10, kind: input, shape index: {}]
  %s11 = inlined_call_operand.hbm [shape: f32[4,128], index: 11, kind: output, shape index: {}]
  %s12 = sld [smem:[#allocation0]]
  $region54: #{lstm1_forward.1} parent=0
    _
  %s14 = ssub.s32 1, %s12
  %s15 = scalar_select 0, %s14, %s12
  $region1: #{lstm1_forward.1} parent=0
    #allocation3 [shape = 'u8[2048]{0}', space=vmem, size = 0x800, scoped, tag = 'output window, operand 0, single buffered']
    #allocation4 [shape = 's32[1]{0}', space=sflag, size = 0x4, scoped, tag = 'scoped memory for lstm1_forward.1']
    %16 = vsyncpa [#allocation4], 0
    // Predicated region
    $region2: #{lstm1_forward.1} parent=1 // pred_check
      _
    $region3: #{lstm1_forward.1} parent=1 // pred_check_branch
      %18 = sbr.rel (0) target = $region5
    $region4: #{lstm1_forward.1} parent=1 // pred_region
      _
    $region5: #{lstm1_forward.1} parent=1 // pred_fallthru
      _
    // Predicated region
    $region6: #{lstm1_forward.1} parent=1 // pred_check
      _
    $region7: #{lstm1_forward.1} parent=1 // pred_check_branch
      %20 = sbr.rel (0) target = $region9
    $region8: #{lstm1_forward.1} parent=1 // pred_region
      _
    $region9: #{lstm1_forward.1} parent=1 // pred_fallthru
      _
    // Predicated region
    $region10: #{lstm1_forward.1} parent=1 // pred_check
      _
    $region11: #{lstm1_forward.1} parent=1 // pred_check_branch
      %22 = sbr.rel (0) target = $region13
    $region12: #{lstm1_forward.1} parent=1 // pred_region
      _
    $region13: #{lstm1_forward.1} parent=1 // pred_fallthru
      _
    // Predicated region
    $region14: #{lstm1_forward.1} parent=1 // pred_check
      _
    $region15: #{lstm1_forward.1} parent=1 // pred_check_branch
      %24 = sbr.rel (0) target = $region17
    $region16: #{lstm1_forward.1} parent=1 // pred_region
      _
    $region17: #{lstm1_forward.1} parent=1 // pred_fallthru
      _
    // Predicated region
    $region18: #{lstm1_forward.1} parent=1 // pred_check
      _
    $region19: #{lstm1_forward.1} parent=1 // pred_check_branch
      %26 = sbr.rel (0) target = $region21
    $region20: #{lstm1_forward.1} parent=1 // pred_region
      _
    $region21: #{lstm1_forward.1} parent=1 // pred_fallthru
      _
    // Predicated region
    $region22: #{lstm1_forward.1} parent=1 // pred_check
      _
    $region23: #{lstm1_forward.1} parent=1 // pred_check_branch
      %28 = sbr.rel (0) target = $region25
    $region24: #{lstm1_forward.1} parent=1 // pred_region
      _
    $region25: #{lstm1_forward.1} parent=1 // pred_fallthru
      _
    // Predicated region
    $region26: #{lstm1_forward.1} parent=1 // pred_check
      _
    $region27: #{lstm1_forward.1} parent=1 // pred_check_branch
      %30 = sbr.rel (0) target = $region29
    $region28: #{lstm1_forward.1} parent=1 // pred_region
      _
    $region29: #{lstm1_forward.1} parent=1 // pred_fallthru
      _
    // Predicated region
    $region30: #{lstm1_forward.1} parent=1 // pred_check
      _
    $region31: #{lstm1_forward.1} parent=1 // pred_check_branch
      %32 = sbr.rel (0) target = $region33
    $region32: #{lstm1_forward.1} parent=1 // pred_region
      _
    $region33: #{lstm1_forward.1} parent=1 // pred_fallthru
      _
    // Predicated region
    $region34: #{lstm1_forward.1} parent=1 // pred_check
      _
    $region35: #{lstm1_forward.1} parent=1 // pred_check_branch
      %34 = sbr.rel (0) target = $region37
    $region36: #{lstm1_forward.1} parent=1 // pred_region
      _
    $region37: #{lstm1_forward.1} parent=1 // pred_fallthru
      _
    // Predicated region
    $region38: #{lstm1_forward.1} parent=1 // pred_check
      _
    $region39: #{lstm1_forward.1} parent=1 // pred_check_branch
      %36 = sbr.rel (0) target = $region41
    $region40: #{lstm1_forward.1} parent=1 // pred_region
      _
    $region41: #{lstm1_forward.1} parent=1 // pred_fallthru
      _
    // Predicated region
    $region42: #{lstm1_forward.1} parent=1 // pred_check
      _
    $region43: #{lstm1_forward.1} parent=1 // pred_check_branch
      %38 = sbr.rel (0) target = $region45
    $region44: #{lstm1_forward.1} parent=1 // pred_region
      _
    $region45: #{lstm1_forward.1} parent=1 // pred_fallthru
      _
    %v39 = vlaneseq
    %v40 = vand.u32 %v39, 127
    %vm41 = vcmp.ge.s32.totalorder %v40, 64
    %vm42 = vcmp.lt.s32.totalorder %v40, 96
    %vm43 = vmand %vm41, %vm42
    %v44 = vld [vmem:[%s0] sm:$0xff]
    %v45 = vld [vmem:[%s0 + $0x8] sm:$0xff]
    %v46 = vld [vmem:[%s1] sm:$0xf]
    %v47 = vld [vmem:[%s1 + $0x4] sm:$0xf]
    %v48 = vunpack.c.l.bf16 %v46
    %v49 = vunpack.c.l.bf16 %v47
    %v50 = vld [vmem:[%s2] sm:$0xf]
    %v51 = vld [vmem:[%s2 + $0x4] sm:$0xf]
    %v52 = vld [vmem:[%s2 + $0x8] sm:$0xf]
    %v53 = vld [vmem:[%s2 + $0xc] sm:$0xf]
    %v54 = vunpack.c.l.bf16 %v50
    %v55 = vunpack.c.l.bf16 %v51
    %v56 = vunpack.c.l.bf16 %v52
    %v57 = vunpack.c.l.bf16 %v53
    %v58 = vld [vmem:[%s3] sm:$0x1]
    %v60 = vperm.slane %v58, 0
    %vm62 = vcmask 130048
    %v64 = vsel %vm62, %v44, 0
    %v67 = vsel %vm62, %v45, 0
    %69 = vmatpush.msra.mxu0 0.0
    %70 = vmatpush.msra.mxu0 0.0
    %71 = vmatpush.msra.mxu0 0.0
    %72 = vmatpush.msra.mxu0 0.0
    %73 = vmatpush.msra.mxu0 0.0
    %74 = vmatpush.msra.mxu0 0.0
    %75 = vmatpush.msra.mxu0 0.0
    %76 = vmatpush.msra.mxu0 0.0
    %77 = vmatpush.msra.mxu0 0.0
    %78 = vmatpush.msra.mxu0 0.0
    %79 = vmatpush.msra.mxu0 0.0
    %80 = vmatpush.msra.mxu0 0.0
    %81 = vmatpush.msra.mxu0 0.0
    %82 = vmatpush.msra.mxu0 0.0
    %83 = vmatpush.msra.mxu0 %v49
    %84 = vmatpush.msra.mxu0 %v48
    %85 = vmatmul.f32.gmra.mxu0 %v64
    %v86 = vpop.f32.mrf.mxu0
    %v87 = vadd.f32 %v60, %v86
    %88 = vmatmul.f32.gmra.mxu0 %v67
    %v89 = vpop.f32.mrf.mxu0
    %v90 = vadd.f32 %v60, %v89
    %91 = vdwg.mxu0
    %vm92 = vcmask 261120
    %v94 = vsel %vm92, 0.0, 0
    %96 = vmatpush.msra.mxu0 0.0
    %97 = vmatpush.msra.mxu0 0.0
    %98 = vmatpush.msra.mxu0 0.0
    %99 = vmatpush.msra.mxu0 0.0
    %100 = vmatpush.msra.mxu0 0.0
    %101 = vmatpush.msra.mxu0 0.0
    %102 = vmatpush.msra.mxu0 0.0
    %103 = vmatpush.msra.mxu0 0.0
    %104 = vmatpush.msra.mxu0 0.0
    %105 = vmatpush.msra.mxu0 0.0
    %106 = vmatpush.msra.mxu0 0.0
    %107 = vmatpush.msra.mxu0 0.0
    %108 = vmatpush.msra.mxu0 %v57
    %109 = vmatpush.msra.mxu0 %v56
    %110 = vmatpush.msra.mxu0 %v55
    %111 = vmatpush.msra.mxu0 %v54
    %112 = vmatmul.f32.gmra.mxu0 %v94
    %v113 = vpop.f32.mrf.mxu0
    %v114 = vadd.f32 0.0, %v113
    %115 = vdwg.mxu0
    %v116 = vadd.f32 %v87, %v114
    %v117 = vxor.u32 %v116, 2147483648
    %v118 = vmul.f32 %v117, 1.442695
    %v119 = vpow.pop %v118
    %v120 = vadd.f32 %v119, 1.0
    %v121 = vrcp.pop %v120
    %v122 = vmul.f32 %v120, %v121
    %v123 = vsub.f32 1.0, %v122
    %v124 = vmul.f32 %v121, %v123
    %v125 = vadd.f32 %v121, %v124
    %vm126 = vweird.f32 %v120
    %vm127 = vweird.f32 %v121
    %vm128 = vmor %vm126, %vm127
    %v129 = vsel %vm128, %v121, %v125
    %v130 = vand.u32 2147483647, %v120
    %vm131 = vcmp.eq.f32.partialorder %v130, 8.507059e+37
    %v132 = vand.u32 %v120, 2147483648
    %v133 = vor.u32 1.1754944e-38, %v132
    %v134 = vsel %vm131, %v133, %v129
    %v135 = vmul.f32 1.0, %v134
    %v136 = vtanh.pop %v116
    %v137 = vsel %vm43, %v136, %v135
    %v138 = vmul.f32 %v137, 0.0
    %140 = vrot.lane.b32.xlu0 %v137, 64
    %v141 = vpop.permute.xlu0 %140
    %v143 = vmul.f32 %v137, %v141
    %145 = vrot.lane.b32.xlu0 %v143, 32
    %v146 = vpop.permute.xlu0 %145
    %v148 = vadd.f32 %v138, %v146
    %v149 = vtanh.pop %v148
    %151 = vrot.lane.b32.xlu0 %v149, 64
    %v152 = vpop.permute.xlu0 %151
    %v154 = vmul.f32 %v137, %v152
    %156 = vrot.lane.b32.xlu0 %v154, 32
    %v157 = vpop.permute.xlu0 %156
    %vm159 = vcmask 254976
    %160 = vst.msk [vmem:[#allocation2] sm:$0x3] %vm159, %v157
    %v161 = vsel %vm92, %v157, 0
    %163 = vmatpush.msra.mxu0 0.0
    %164 = vmatpush.msra.mxu0 0.0
    %165 = vmatpush.msra.mxu0 0.0
    %166 = vmatpush.msra.mxu0 0.0
    %167 = vmatpush.msra.mxu0 0.0
    %168 = vmatpush.msra.mxu0 0.0
    %169 = vmatpush.msra.mxu0 0.0
    %170 = vmatpush.msra.mxu0 0.0
    %171 = vmatpush.msra.mxu0 0.0
    %172 = vmatpush.msra.mxu0 0.0
    %173 = vmatpush.msra.mxu0 0.0
    %174 = vmatpush.msra.mxu0 0.0
    %175 = vmatpush.msra.mxu0 %v57
    %176 = vmatpush.msra.mxu0 %v56
    %177 = vmatpush.msra.mxu0 %v55
    %178 = vmatpush.msra.mxu0 %v54
    %179 = vmatmul.f32.gmra.mxu0 %v161
    %v180 = vpop.f32.mrf.mxu0
    %v181 = vadd.f32 0.0, %v180
    %182 = vdwg.mxu0
    %v184 = vrot.slane %v181, 6
    %v186 = vadd.f32 %v87, %v184
    %v187 = vxor.u32 %v186, 2147483648
    %v188 = vmul.f32 %v187, 1.442695
    %v189 = vpow.pop %v188
    %v190 = vadd.f32 %v189, 1.0
    %v191 = vrcp.pop %v190
    %v192 = vmul.f32 %v190, %v191
    %v193 = vsub.f32 1.0, %v192
    %v194 = vmul.f32 %v191, %v193
    %v195 = vadd.f32 %v191, %v194
    %vm196 = vweird.f32 %v190
    %vm197 = vweird.f32 %v191
    %vm198 = vmor %vm196, %vm197
    %v199 = vsel %vm198, %v191, %v195
    %v200 = vand.u32 2147483647, %v190
    %vm201 = vcmp.eq.f32.partialorder %v200, 8.507059e+37
    %v202 = vand.u32 %v190, 2147483648
    %v203 = vor.u32 1.1754944e-38, %v202
    %v204 = vsel %vm201, %v203, %v199
    %v205 = vmul.f32 1.0, %v204
    %v206 = vtanh.pop %v186
    %v207 = vsel %vm43, %v206, %v205
    %v209 = vrot.slane %v148, 6
    %v211 = vmul.f32 %v207, %v209
    %213 = vrot.lane.b32.xlu0 %v207, 64
    %v214 = vpop.permute.xlu0 %213
    %v216 = vmul.f32 %v207, %v214
    %218 = vrot.lane.b32.xlu0 %v216, 32
    %v219 = vpop.permute.xlu0 %218
    %v221 = vadd.f32 %v211, %v219
    %v222 = vtanh.pop %v221
    %224 = vrot.lane.b32.xlu0 %v222, 64
    %v225 = vpop.permute.xlu0 %224
    %v227 = vmul.f32 %v207, %v225
    %229 = vrot.lane.b32.xlu0 %v227, 32
    %v230 = vpop.permute.xlu0 %229
    %vm232 = vcmask 257026
    %233 = vst.msk [vmem:[#allocation2] sm:$0xc] %vm232, %v230
    %v234 = vrot.slane %v227, 2
    %235 = vrot.lane.b32.xlu0 %v234, 32
    %v236 = vpop.permute.xlu0 %235
    %v237 = vsel %vm92, %v236, 0
    %239 = vmatpush.msra.mxu0 0.0
    %240 = vmatpush.msra.mxu0 0.0
    %241 = vmatpush.msra.mxu0 0.0
    %242 = vmatpush.msra.mxu0 0.0
    %243 = vmatpush.msra.mxu0 0.0
    %244 = vmatpush.msra.mxu0 0.0
    %245 = vmatpush.msra.mxu0 0.0
    %246 = vmatpush.msra.mxu0 0.0
    %247 = vmatpush.msra.mxu0 0.0
    %248 = vmatpush.msra.mxu0 0.0
    %249 = vmatpush.msra.mxu0 0.0
    %250 = vmatpush.msra.mxu0 0.0
    %251 = vmatpush.msra.mxu0 %v57
    %252 = vmatpush.msra.mxu0 %v56
    %253 = vmatpush.msra.mxu0 %v55
    %254 = vmatpush.msra.mxu0 %v54
    %255 = vmatmul.f32.gmra.mxu0 %v237
    %v256 = vpop.f32.mrf.mxu0
    %v257 = vadd.f32 0.0, %v256
    %258 = vdwg.mxu0
    %v260 = vrot.slane %v257, 4
    %v262 = vadd.f32 %v87, %v260
    %v263 = vxor.u32 %v262, 2147483648
    %v264 = vmul.f32 %v263, 1.442695
    %v265 = vpow.pop %v264
    %v266 = vadd.f32 %v265, 1.0
    %v267 = vrcp.pop %v266
    %v268 = vmul.f32 %v266, %v267
    %v269 = vsub.f32 1.0, %v268
    %v270 = vmul.f32 %v267, %v269
    %v271 = vadd.f32 %v267, %v270
    %vm272 = vweird.f32 %v266
    %vm273 = vweird.f32 %v267
    %vm274 = vmor %vm272, %vm273
    %v275 = vsel %vm274, %v267, %v271
    %v276 = vand.u32 2147483647, %v266
    %vm277 = vcmp.eq.f32.partialorder %v276, 8.507059e+37
    %v278 = vand.u32 %v266, 2147483648
    %v279 = vor.u32 1.1754944e-38, %v278
    %v280 = vsel %vm277, %v279, %v275
    %v281 = vmul.f32 1.0, %v280
    %v282 = vtanh.pop %v262
    %v283 = vsel %vm43, %v282, %v281
    %v285 = vrot.slane %v221, 6
    %v287 = vmul.f32 %v283, %v285
    %289 = vrot.lane.b32.xlu0 %v283, 64
    %v290 = vpop.permute.xlu0 %289
    %v292 = vmul.f32 %v283, %v290
    %294 = vrot.lane.b32.xlu0 %v292, 32
    %v295 = vpop.permute.xlu0 %294
    %v297 = vadd.f32 %v287, %v295
    %v298 = vtanh.pop %v297
    %300 = vrot.lane.b32.xlu0 %v298, 64
    %v301 = vpop.permute.xlu0 %300
    %v303 = vmul.f32 %v283, %v301
    %305 = vrot.lane.b32.xlu0 %v303, 32
    %v306 = vpop.permute.xlu0 %305
    %vm308 = vcmask 259076
    %309 = vst.msk [vmem:[#allocation2] sm:$0x30] %vm308, %v306
    %v310 = vrot.slane %v303, 4
    %311 = vrot.lane.b32.xlu0 %v310, 32
    %v312 = vpop.permute.xlu0 %311
    %v313 = vsel %vm92, %v312, 0
    %315 = vmatpush.msra.mxu0 0.0
    %316 = vmatpush.msra.mxu0 0.0
    %317 = vmatpush.msra.mxu0 0.0
    %318 = vmatpush.msra.mxu0 0.0
    %319 = vmatpush.msra.mxu0 0.0
    %320 = vmatpush.msra.mxu0 0.0
    %321 = vmatpush.msra.mxu0 0.0
    %322 = vmatpush.msra.mxu0 0.0
    %323 = vmatpush.msra.mxu0 0.0
    %324 = vmatpush.msra.mxu0 0.0
    %325 = vmatpush.msra.mxu0 0.0
    %326 = vmatpush.msra.mxu0 0.0
    %327 = vmatpush.msra.mxu0 %v57
    %328 = vmatpush.msra.mxu0 %v56
    %329 = vmatpush.msra.mxu0 %v55
    %330 = vmatpush.msra.mxu0 %v54
    %331 = vmatmul.f32.gmra.mxu0 %v313
    %v332 = vpop.f32.mrf.mxu0
    %v333 = vadd.f32 0.0, %v332
    %334 = vdwg.mxu0
    %v336 = vrot.slane %v333, 2
    %v338 = vadd.f32 %v87, %v336
    %v339 = vxor.u32 %v338, 2147483648
    %v340 = vmul.f32 %v339, 1.442695
    %v341 = vpow.pop %v340
    %v342 = vadd.f32 %v341, 1.0
    %v343 = vrcp.pop %v342
    %v344 = vmul.f32 %v342, %v343
    %v345 = vsub.f32 1.0, %v344
    %v346 = vmul.f32 %v343, %v345
    %v347 = vadd.f32 %v343, %v346
    %vm348 = vweird.f32 %v342
    %vm349 = vweird.f32 %v343
    %vm350 = vmor %vm348, %vm349
    %v351 = vsel %vm350, %v343, %v347
    %v352 = vand.u32 2147483647, %v342
    %vm353 = vcmp.eq.f32.partialorder %v352, 8.507059e+37
    %v354 = vand.u32 %v342, 2147483648
    %v355 = vor.u32 1.1754944e-38, %v354
    %v356 = vsel %vm353, %v355, %v351
    %v357 = vmul.f32 1.0, %v356
    %v358 = vtanh.pop %v338
    %v359 = vsel %vm43, %v358, %v357
    %v361 = vrot.slane %v297, 6
    %v363 = vmul.f32 %v359, %v361
    %365 = vrot.lane.b32.xlu0 %v359, 64
    %v366 = vpop.permute.xlu0 %365
    %v368 = vmul.f32 %v359, %v366
    %370 = vrot.lane.b32.xlu0 %v368, 32
    %v371 = vpop.permute.xlu0 %370
    %v373 = vadd.f32 %v363, %v371
    %v374 = vtanh.pop %v373
    %376 = vrot.lane.b32.xlu0 %v374, 64
    %v377 = vpop.permute.xlu0 %376
    %v379 = vmul.f32 %v359, %v377
    %381 = vrot.lane.b32.xlu0 %v379, 32
    %v382 = vpop.permute.xlu0 %381
    %vm384 = vcmask 261126
    %385 = vst.msk [vmem:[#allocation2] sm:$0xc0] %vm384, %v382
    %v386 = vrot.slane %v379, 6
    %387 = vrot.lane.b32.xlu0 %v386, 32
    %v388 = vpop.permute.xlu0 %387
    %v389 = vsel %vm92, %v388, 0
    %391 = vmatpush.msra.mxu0 0.0
    %392 = vmatpush.msra.mxu0 0.0
    %393 = vmatpush.msra.mxu0 0.0
    %394 = vmatpush.msra.mxu0 0.0
    %395 = vmatpush.msra.mxu0 0.0
    %396 = vmatpush.msra.mxu0 0.0
    %397 = vmatpush.msra.mxu0 0.0
    %398 = vmatpush.msra.mxu0 0.0
    %399 = vmatpush.msra.mxu0 0.0
    %400 = vmatpush.msra.mxu0 0.0
    %401 = vmatpush.msra.mxu0 0.0
    %402 = vmatpush.msra.mxu0 0.0
    %403 = vmatpush.msra.mxu0 %v57
    %404 = vmatpush.msra.mxu0 %v56
    %405 = vmatpush.msra.mxu0 %v55
    %406 = vmatpush.msra.mxu0 %v54
    %407 = vmatmul.f32.gmra.mxu0 %v389
    %v408 = vpop.f32.mrf.mxu0
    %v409 = vadd.f32 0.0, %v408
    %410 = vdwg.mxu0
    %v411 = vadd.f32 %v90, %v409
    %v412 = vxor.u32 %v411, 2147483648
    %v413 = vmul.f32 %v412, 1.442695
    %v414 = vpow.pop %v413
    %v415 = vadd.f32 %v414, 1.0
    %v416 = vrcp.pop %v415
    %v417 = vmul.f32 %v415, %v416
    %v418 = vsub.f32 1.0, %v417
    %v419 = vmul.f32 %v416, %v418
    %v420 = vadd.f32 %v416, %v419
    %vm421 = vweird.f32 %v415
    %vm422 = vweird.f32 %v416
    %vm423 = vmor %vm421, %vm422
    %v424 = vsel %vm423, %v416, %v420
    %v425 = vand.u32 2147483647, %v415
    %vm426 = vcmp.eq.f32.partialorder %v425, 8.507059e+37
    %v427 = vand.u32 %v415, 2147483648
    %v428 = vor.u32 1.1754944e-38, %v427
    %v429 = vsel %vm426, %v428, %v424
    %v430 = vmul.f32 1.0, %v429
    %v431 = vtanh.pop %v411
    %v432 = vsel %vm43, %v431, %v430
    %v434 = vrot.slane %v373, 6
    %v436 = vmul.f32 %v432, %v434
    %438 = vrot.lane.b32.xlu0 %v432, 64
    %v439 = vpop.permute.xlu0 %438
    %v441 = vmul.f32 %v432, %v439
    %443 = vrot.lane.b32.xlu0 %v441, 32
    %v444 = vpop.permute.xlu0 %443
    %v446 = vadd.f32 %v436, %v444
    %v447 = vtanh.pop %v446
    %449 = vrot.lane.b32.xlu0 %v447, 64
    %v450 = vpop.permute.xlu0 %449
    %v452 = vmul.f32 %v432, %v450
    %454 = vrot.lane.b32.xlu0 %v452, 32
    %v455 = vpop.permute.xlu0 %454
    %457 = vst.msk [vmem:[#allocation2 + $0x8] sm:$0x3] %vm159, %v455
    %v458 = vsel %vm92, %v455, 0
    %460 = vmatpush.msra.mxu0 0.0
    %461 = vmatpush.msra.mxu0 0.0
    %462 = vmatpush.msra.mxu0 0.0
    %463 = vmatpush.msra.mxu0 0.0
    %464 = vmatpush.msra.mxu0 0.0
    %465 = vmatpush.msra.mxu0 0.0
    %466 = vmatpush.msra.mxu0 0.0
    %467 = vmatpush.msra.mxu0 0.0
    %468 = vmatpush.msra.mxu0 0.0
    %469 = vmatpush.msra.mxu0 0.0
    %470 = vmatpush.msra.mxu0 0.0
    %471 = vmatpush.msra.mxu0 0.0
    %472 = vmatpush.msra.mxu0 %v57
    %473 = vmatpush.msra.mxu0 %v56
    %474 = vmatpush.msra.mxu0 %v55
    %475 = vmatpush.msra.mxu0 %v54
    %476 = vmatmul.f32.gmra.mxu0 %v458
    %v477 = vpop.f32.mrf.mxu0
    %v478 = vadd.f32 0.0, %v477
    %479 = vdwg.mxu0
    %v481 = vrot.slane %v478, 6
    %v483 = vadd.f32 %v90, %v481
    %v484 = vxor.u32 %v483, 2147483648
    %v485 = vmul.f32 %v484, 1.442695
    %v486 = vpow.pop %v485
    %v487 = vadd.f32 %v486, 1.0
    %v488 = vrcp.pop %v487
    %v489 = vmul.f32 %v487, %v488
    %v490 = vsub.f32 1.0, %v489
    %v491 = vmul.f32 %v488, %v490
    %v492 = vadd.f32 %v488, %v491
    %vm493 = vweird.f32 %v487
    %vm494 = vweird.f32 %v488
    %vm495 = vmor %vm493, %vm494
    %v496 = vsel %vm495, %v488, %v492
    %v497 = vand.u32 2147483647, %v487
    %vm498 = vcmp.eq.f32.partialorder %v497, 8.507059e+37
    %v499 = vand.u32 %v487, 2147483648
    %v500 = vor.u32 1.1754944e-38, %v499
    %v501 = vsel %vm498, %v500, %v496
    %v502 = vmul.f32 1.0, %v501
    %v503 = vtanh.pop %v483
    %v504 = vsel %vm43, %v503, %v502
    %v506 = vrot.slane %v446, 6
    %v508 = vmul.f32 %v504, %v506
    %510 = vrot.lane.b32.xlu0 %v504, 64
    %v511 = vpop.permute.xlu0 %510
    %v513 = vmul.f32 %v504, %v511
    %515 = vrot.lane.b32.xlu0 %v513, 32
    %v516 = vpop.permute.xlu0 %515
    %v518 = vadd.f32 %v508, %v516
    %v519 = vtanh.pop %v518
    %521 = vrot.lane.b32.xlu0 %v519, 64
    %v522 = vpop.permute.xlu0 %521
    %v524 = vmul.f32 %v504, %v522
    %526 = vrot.lane.b32.xlu0 %v524, 32
    %v527 = vpop.permute.xlu0 %526
    %529 = vst.msk [vmem:[#allocation2 + $0x8] sm:$0xc] %vm232, %v527
    %v530 = vrot.slane %v524, 2
    %531 = vrot.lane.b32.xlu0 %v530, 32
    %v532 = vpop.permute.xlu0 %531
    %v533 = vsel %vm92, %v532, 0
    %535 = vmatpush.msra.mxu0 0.0
    %536 = vmatpush.msra.mxu0 0.0
    %537 = vmatpush.msra.mxu0 0.0
    %538 = vmatpush.msra.mxu0 0.0
    %539 = vmatpush.msra.mxu0 0.0
    %540 = vmatpush.msra.mxu0 0.0
    %541 = vmatpush.msra.mxu0 0.0
    %542 = vmatpush.msra.mxu0 0.0
    %543 = vmatpush.msra.mxu0 0.0
    %544 = vmatpush.msra.mxu0 0.0
    %545 = vmatpush.msra.mxu0 0.0
    %546 = vmatpush.msra.mxu0 0.0
    %547 = vmatpush.msra.mxu0 %v57
    %548 = vmatpush.msra.mxu0 %v56
    %549 = vmatpush.msra.mxu0 %v55
    %550 = vmatpush.msra.mxu0 %v54
    %551 = vmatmul.f32.gmra.mxu0 %v533
    %v552 = vpop.f32.mrf.mxu0
    %v553 = vadd.f32 0.0, %v552
    %554 = vdwg.mxu0
    %v556 = vrot.slane %v553, 4
    %v558 = vadd.f32 %v90, %v556
    %v559 = vxor.u32 %v558, 2147483648
    %v560 = vmul.f32 %v559, 1.442695
    %v561 = vpow.pop %v560
    %v562 = vadd.f32 %v561, 1.0
    %v563 = vrcp.pop %v562
    %v564 = vmul.f32 %v562, %v563
    %v565 = vsub.f32 1.0, %v564
    %v566 = vmul.f32 %v563, %v565
    %v567 = vadd.f32 %v563, %v566
    %vm568 = vweird.f32 %v562
    %vm569 = vweird.f32 %v563
    %vm570 = vmor %vm568, %vm569
    %v571 = vsel %vm570, %v563, %v567
    %v572 = vand.u32 2147483647, %v562
    %vm573 = vcmp.eq.f32.partialorder %v572, 8.507059e+37
    %v574 = vand.u32 %v562, 2147483648
    %v575 = vor.u32 1.1754944e-38, %v574
    %v576 = vsel %vm573, %v575, %v571
    %v577 = vmul.f32 1.0, %v576
    %v578 = vtanh.pop %v558
    %v579 = vsel %vm43, %v578, %v577
    %v581 = vrot.slane %v518, 6
    %v583 = vmul.f32 %v579, %v581
    %585 = vrot.lane.b32.xlu0 %v579, 64
    %v586 = vpop.permute.xlu0 %585
    %v588 = vmul.f32 %v579, %v586
    %590 = vrot.lane.b32.xlu0 %v588, 32
    %v591 = vpop.permute.xlu0 %590
    %v593 = vadd.f32 %v583, %v591
    %v594 = vtanh.pop %v593
    %596 = vrot.lane.b32.xlu0 %v594, 64
    %v597 = vpop.permute.xlu0 %596
    %v599 = vmul.f32 %v579, %v597
    %601 = vrot.lane.b32.xlu0 %v599, 32
    %v602 = vpop.permute.xlu0 %601
    %604 = vst.msk [vmem:[#allocation2 + $0x8] sm:$0x30] %vm308, %v602
    %v605 = vrot.slane %v599, 4
    %606 = vrot.lane.b32.xlu0 %v605, 32
    %v607 = vpop.permute.xlu0 %606
    %v608 = vsel %vm92, %v607, 0
    %610 = vmatpush.msra.mxu0 0.0
    %611 = vmatpush.msra.mxu0 0.0
    %612 = vmatpush.msra.mxu0 0.0
    %613 = vmatpush.msra.mxu0 0.0
    %614 = vmatpush.msra.mxu0 0.0
    %615 = vmatpush.msra.mxu0 0.0
    %616 = vmatpush.msra.mxu0 0.0
    %617 = vmatpush.msra.mxu0 0.0
    %618 = vmatpush.msra.mxu0 0.0
    %619 = vmatpush.msra.mxu0 0.0
    %620 = vmatpush.msra.mxu0 0.0
    %621 = vmatpush.msra.mxu0 0.0
    %622 = vmatpush.msra.mxu0 %v57
    %623 = vmatpush.msra.mxu0 %v56
    %624 = vmatpush.msra.mxu0 %v55
    %625 = vmatpush.msra.mxu0 %v54
    %626 = vmatmul.f32.gmra.mxu0 %v608
    %v627 = vpop.f32.mrf.mxu0
    %v628 = vadd.f32 0.0, %v627
    %629 = vdwg.mxu0
    %v631 = vrot.slane %v628, 2
    %v633 = vadd.f32 %v90, %v631
    %v634 = vxor.u32 %v633, 2147483648
    %v635 = vmul.f32 %v634, 1.442695
    %v636 = vpow.pop %v635
    %v637 = vadd.f32 %v636, 1.0
    %v638 = vrcp.pop %v637
    %v639 = vmul.f32 %v637, %v638
    %v640 = vsub.f32 1.0, %v639
    %v641 = vmul.f32 %v638, %v640
    %v642 = vadd.f32 %v638, %v641
    %vm643 = vweird.f32 %v637
    %vm644 = vweird.f32 %v638
    %vm645 = vmor %vm643, %vm644
    %v646 = vsel %vm645, %v638, %v642
    %v647 = vand.u32 2147483647, %v637
    %vm648 = vcmp.eq.f32.partialorder %v647, 8.507059e+37
    %v649 = vand.u32 %v637, 2147483648
    %v650 = vor.u32 1.1754944e-38, %v649
    %v651 = vsel %vm648, %v650, %v646
    %v652 = vmul.f32 1.0, %v651
    %v653 = vtanh.pop %v633
    %v654 = vsel %vm43, %v653, %v652
    %v656 = vrot.slane %v593, 6
    %v658 = vmul.f32 %v654, %v656
    %660 = vrot.lane.b32.xlu0 %v654, 64
    %v661 = vpop.permute.xlu0 %660
    %v663 = vmul.f32 %v654, %v661
    %665 = vrot.lane.b32.xlu0 %v663, 32
    %v666 = vpop.permute.xlu0 %665
    %v668 = vadd.f32 %v658, %v666
    %v669 = vtanh.pop %v668
    %671 = vrot.lane.b32.xlu0 %v669, 64
    %v672 = vpop.permute.xlu0 %671
    %v674 = vmul.f32 %v654, %v672
    %676 = vrot.lane.b32.xlu0 %v674, 32
    %v677 = vpop.permute.xlu0 %676
    %679 = vst.msk [vmem:[#allocation2 + $0x8] sm:$0xc0] %vm384, %v677
    %v680 = vld [vmem:[#allocation2] sm:$0xff]
    %v681 = vld [vmem:[#allocation2 + $0x8] sm:$0xff]
    %v682 = vld [vmem:[%s4] sm:$0xf]
    %v683 = vld [vmem:[%s4 + $0x4] sm:$0xf]
    %v684 = vld [vmem:[%s4 + $0x8] sm:$0xf]
    %v685 = vld [vmem:[%s4 + $0xc] sm:$0xf]
    %v686 = vunpack.c.l.bf16 %v682
    %v687 = vunpack.c.l.bf16 %v683
    %v688 = vunpack.c.l.bf16 %v684
    %v689 = vunpack.c.l.bf16 %v685
    %v690 = vld [vmem:[%s5] sm:$0xf]
    %v691 = vld [vmem:[%s5 + $0x4] sm:$0xf]
    %v692 = vld [vmem:[%s5 + $0x8] sm:$0xf]
    %v693 = vld [vmem:[%s5 + $0xc] sm:$0xf]
    %v694 = vunpack.c.l.bf16 %v690
    %v695 = vunpack.c.l.bf16 %v691
    %v696 = vunpack.c.l.bf16 %v692
    %v697 = vunpack.c.l.bf16 %v693
    %v698 = vld [vmem:[%s6] sm:$0x1]
    %v700 = vperm.slane %v698, 0
    %v703 = vsel %vm92, %v680, 0
    %v706 = vsel %vm92, %v681, 0
    %708 = vmatpush.msra.mxu0 0.0
    %709 = vmatpush.msra.mxu0 0.0
    %710 = vmatpush.msra.mxu0 0.0
    %711 = vmatpush.msra.mxu0 0.0
    %712 = vmatpush.msra.mxu0 0.0
    %713 = vmatpush.msra.mxu0 0.0
    %714 = vmatpush.msra.mxu0 0.0
    %715 = vmatpush.msra.mxu0 0.0
    %716 = vmatpush.msra.mxu0 0.0
    %717 = vmatpush.msra.mxu0 0.0
    %718 = vmatpush.msra.mxu0 0.0
    %719 = vmatpush.msra.mxu0 0.0
    %720 = vmatpush.msra.mxu0 %v689
    %721 = vmatpush.msra.mxu0 %v688
    %722 = vmatpush.msra.mxu0 %v687
    %723 = vmatpush.msra.mxu0 %v686
    %724 = vmatmul.f32.gmra.mxu0 %v703
    %v725 = vpop.f32.mrf.mxu0
    %v726 = vadd.f32 %v700, %v725
    %727 = vmatmul.f32.gmra.mxu0 %v706
    %v728 = vpop.f32.mrf.mxu0
    %v729 = vadd.f32 %v700, %v728
    %730 = vdwg.mxu0
    %731 = vmatpush.msra.mxu0 0.0
    %732 = vmatpush.msra.mxu0 0.0
    %733 = vmatpush.msra.mxu0 0.0
    %734 = vmatpush.msra.mxu0 0.0
    %735 = vmatpush.msra.mxu0 0.0
    %736 = vmatpush.msra.mxu0 0.0
    %737 = vmatpush.msra.mxu0 0.0
    %738 = vmatpush.msra.mxu0 0.0
    %739 = vmatpush.msra.mxu0 0.0
    %740 = vmatpush.msra.mxu0 0.0
    %741 = vmatpush.msra.mxu0 0.0
    %742 = vmatpush.msra.mxu0 0.0
    %743 = vmatpush.msra.mxu0 %v697
    %744 = vmatpush.msra.mxu0 %v696
    %745 = vmatpush.msra.mxu0 %v695
    %746 = vmatpush.msra.mxu0 %v694
    %747 = vmatmul.f32.gmra.mxu0 %v94
    %v748 = vpop.f32.mrf.mxu0
    %v749 = vadd.f32 0.0, %v748
    %750 = vdwg.mxu0
    %v751 = vadd.f32 %v726, %v749
    %v752 = vxor.u32 %v751, 2147483648
    %v753 = vmul.f32 %v752, 1.442695
    %v754 = vpow.pop %v753
    %v755 = vadd.f32 %v754, 1.0
    %v756 = vrcp.pop %v755
    %v757 = vmul.f32 %v755, %v756
    %v758 = vsub.f32 1.0, %v757
    %v759 = vmul.f32 %v756, %v758
    %v760 = vadd.f32 %v756, %v759
    %vm761 = vweird.f32 %v755
    %vm762 = vweird.f32 %v756
    %vm763 = vmor %vm761, %vm762
    %v764 = vsel %vm763, %v756, %v760
    %v765 = vand.u32 2147483647, %v755
    %vm766 = vcmp.eq.f32.partialorder %v765, 8.507059e+37
    %v767 = vand.u32 %v755, 2147483648
    %v768 = vor.u32 1.1754944e-38, %v767
    %v769 = vsel %vm766, %v768, %v764
    %v770 = vmul.f32 1.0, %v769
    %v771 = vtanh.pop %v751
    %v772 = vsel %vm43, %v771, %v770
    %v773 = vmul.f32 %v772, 0.0
    %775 = vrot.lane.b32.xlu0 %v772, 64
    %v776 = vpop.permute.xlu0 %775
    %v778 = vmul.f32 %v772, %v776
    %780 = vrot.lane.b32.xlu0 %v778, 32
    %v781 = vpop.permute.xlu0 %780
    %v783 = vadd.f32 %v773, %v781
    %v784 = vtanh.pop %v783
    %786 = vrot.lane.b32.xlu0 %v784, 64
    %v787 = vpop.permute.xlu0 %786
    %v789 = vmul.f32 %v772, %v787
    %791 = vrot.lane.b32.xlu0 %v789, 32
    %v792 = vpop.permute.xlu0 %791
    %v793 = vsel %vm92, %v792, 0
    %795 = vmatpush.msra.mxu0 0.0
    %796 = vmatpush.msra.mxu0 0.0
    %797 = vmatpush.msra.mxu0 0.0
    %798 = vmatpush.msra.mxu0 0.0
    %799 = vmatpush.msra.mxu0 0.0
    %800 = vmatpush.msra.mxu0 0.0
    %801 = vmatpush.msra.mxu0 0.0
    %802 = vmatpush.msra.mxu0 0.0
    %803 = vmatpush.msra.mxu0 0.0
    %804 = vmatpush.msra.mxu0 0.0
    %805 = vmatpush.msra.mxu0 0.0
    %806 = vmatpush.msra.mxu0 0.0
    %807 = vmatpush.msra.mxu0 %v697
    %808 = vmatpush.msra.mxu0 %v696
    %809 = vmatpush.msra.mxu0 %v695
    %810 = vmatpush.msra.mxu0 %v694
    %811 = vmatmul.f32.gmra.mxu0 %v793
    %v812 = vpop.f32.mrf.mxu0
    %v813 = vadd.f32 0.0, %v812
    %814 = vdwg.mxu0
    %v816 = vrot.slane %v813, 6
    %v818 = vadd.f32 %v726, %v816
    %v819 = vxor.u32 %v818, 2147483648
    %v820 = vmul.f32 %v819, 1.442695
    %v821 = vpow.pop %v820
    %v822 = vadd.f32 %v821, 1.0
    %v823 = vrcp.pop %v822
    %v824 = vmul.f32 %v822, %v823
    %v825 = vsub.f32 1.0, %v824
    %v826 = vmul.f32 %v823, %v825
    %v827 = vadd.f32 %v823, %v826
    %vm828 = vweird.f32 %v822
    %vm829 = vweird.f32 %v823
    %vm830 = vmor %vm828, %vm829
    %v831 = vsel %vm830, %v823, %v827
    %v832 = vand.u32 2147483647, %v822
    %vm833 = vcmp.eq.f32.partialorder %v832, 8.507059e+37
    %v834 = vand.u32 %v822, 2147483648
    %v835 = vor.u32 1.1754944e-38, %v834
    %v836 = vsel %vm833, %v835, %v831
    %v837 = vmul.f32 1.0, %v836
    %v838 = vtanh.pop %v818
    %v839 = vsel %vm43, %v838, %v837
    %v841 = vrot.slane %v783, 6
    %v843 = vmul.f32 %v839, %v841
    %845 = vrot.lane.b32.xlu0 %v839, 64
    %v846 = vpop.permute.xlu0 %845
    %v848 = vmul.f32 %v839, %v846
    %850 = vrot.lane.b32.xlu0 %v848, 32
    %v851 = vpop.permute.xlu0 %850
    %v853 = vadd.f32 %v843, %v851
    %v854 = vtanh.pop %v853
    %856 = vrot.lane.b32.xlu0 %v854, 64
    %v857 = vpop.permute.xlu0 %856
    %v859 = vmul.f32 %v839, %v857
    %v861 = vrot.slane %v859, 2
    %862 = vrot.lane.b32.xlu0 %v861, 32
    %v863 = vpop.permute.xlu0 %862
    %v864 = vsel %vm92, %v863, 0
    %866 = vmatpush.msra.mxu0 0.0
    %867 = vmatpush.msra.mxu0 0.0
    %868 = vmatpush.msra.mxu0 0.0
    %869 = vmatpush.msra.mxu0 0.0
    %870 = vmatpush.msra.mxu0 0.0
    %871 = vmatpush.msra.mxu0 0.0
    %872 = vmatpush.msra.mxu0 0.0
    %873 = vmatpush.msra.mxu0 0.0
    %874 = vmatpush.msra.mxu0 0.0
    %875 = vmatpush.msra.mxu0 0.0
    %876 = vmatpush.msra.mxu0 0.0
    %877 = vmatpush.msra.mxu0 0.0
    %878 = vmatpush.msra.mxu0 %v697
    %879 = vmatpush.msra.mxu0 %v696
    %880 = vmatpush.msra.mxu0 %v695
    %881 = vmatpush.msra.mxu0 %v694
    %882 = vmatmul.f32.gmra.mxu0 %v864
    %v883 = vpop.f32.mrf.mxu0
    %v884 = vadd.f32 0.0, %v883
    %885 = vdwg.mxu0
    %v887 = vrot.slane %v884, 4
    %v889 = vadd.f32 %v726, %v887
    %v890 = vxor.u32 %v889, 2147483648
    %v891 = vmul.f32 %v890, 1.442695
    %v892 = vpow.pop %v891
    %v893 = vadd.f32 %v892, 1.0
    %v894 = vrcp.pop %v893
    %v895 = vmul.f32 %v893, %v894
    %v896 = vsub.f32 1.0, %v895
    %v897 = vmul.f32 %v894, %v896
    %v898 = vadd.f32 %v894, %v897
    %vm899 = vweird.f32 %v893
    %vm900 = vweird.f32 %v894
    %vm901 = vmor %vm899, %vm900
    %v902 = vsel %vm901, %v894, %v898
    %v903 = vand.u32 2147483647, %v893
    %vm904 = vcmp.eq.f32.partialorder %v903, 8.507059e+37
    %v905 = vand.u32 %v893, 2147483648
    %v906 = vor.u32 1.1754944e-38, %v905
    %v907 = vsel %vm904, %v906, %v902
    %v908 = vmul.f32 1.0, %v907
    %v909 = vtanh.pop %v889
    %v910 = vsel %vm43, %v909, %v908
    %v912 = vrot.slane %v853, 6
    %v914 = vmul.f32 %v910, %v912
    %916 = vrot.lane.b32.xlu0 %v910, 64
    %v917 = vpop.permute.xlu0 %916
    %v919 = vmul.f32 %v910, %v917
    %921 = vrot.lane.b32.xlu0 %v919, 32
    %v922 = vpop.permute.xlu0 %921
    %v924 = vadd.f32 %v914, %v922
    %v925 = vtanh.pop %v924
    %927 = vrot.lane.b32.xlu0 %v925, 64
    %v928 = vpop.permute.xlu0 %927
    %v930 = vmul.f32 %v910, %v928
    %v932 = vrot.slane %v930, 4
    %933 = vrot.lane.b32.xlu0 %v932, 32
    %v934 = vpop.permute.xlu0 %933
    %v935 = vsel %vm92, %v934, 0
    %937 = vmatpush.msra.mxu0 0.0
    %938 = vmatpush.msra.mxu0 0.0
    %939 = vmatpush.msra.mxu0 0.0
    %940 = vmatpush.msra.mxu0 0.0
    %941 = vmatpush.msra.mxu0 0.0
    %942 = vmatpush.msra.mxu0 0.0
    %943 = vmatpush.msra.mxu0 0.0
    %944 = vmatpush.msra.mxu0 0.0
    %945 = vmatpush.msra.mxu0 0.0
    %946 = vmatpush.msra.mxu0 0.0
    %947 = vmatpush.msra.mxu0 0.0
    %948 = vmatpush.msra.mxu0 0.0
    %949 = vmatpush.msra.mxu0 %v697
    %950 = vmatpush.msra.mxu0 %v696
    %951 = vmatpush.msra.mxu0 %v695
    %952 = vmatpush.msra.mxu0 %v694
    %953 = vmatmul.f32.gmra.mxu0 %v935
    %v954 = vpop.f32.mrf.mxu0
    %v955 = vadd.f32 0.0, %v954
    %956 = vdwg.mxu0
    %v958 = vrot.slane %v955, 2
    %v960 = vadd.f32 %v726, %v958
    %v961 = vxor.u32 %v960, 2147483648
    %v962 = vmul.f32 %v961, 1.442695
    %v963 = vpow.pop %v962
    %v964 = vadd.f32 %v963, 1.0
    %v965 = vrcp.pop %v964
    %v966 = vmul.f32 %v964, %v965
    %v967 = vsub.f32 1.0, %v966
    %v968 = vmul.f32 %v965, %v967
    %v969 = vadd.f32 %v965, %v968
    %vm970 = vweird.f32 %v964
    %vm971 = vweird.f32 %v965
    %vm972 = vmor %vm970, %vm971
    %v973 = vsel %vm972, %v965, %v969
    %v974 = vand.u32 2147483647, %v964
    %vm975 = vcmp.eq.f32.partialorder %v974, 8.507059e+37
    %v976 = vand.u32 %v964, 2147483648
    %v977 = vor.u32 1.1754944e-38, %v976
    %v978 = vsel %vm975, %v977, %v973
    %v979 = vmul.f32 1.0, %v978
    %v980 = vtanh.pop %v960
    %v981 = vsel %vm43, %v980, %v979
    %v983 = vrot.slane %v924, 6
    %v985 = vmul.f32 %v981, %v983
    %987 = vrot.lane.b32.xlu0 %v981, 64
    %v988 = vpop.permute.xlu0 %987
    %v990 = vmul.f32 %v981, %v988
    %992 = vrot.lane.b32.xlu0 %v990, 32
    %v993 = vpop.permute.xlu0 %992
    %v995 = vadd.f32 %v985, %v993
    %v996 = vtanh.pop %v995
    %998 = vrot.lane.b32.xlu0 %v996, 64
    %v999 = vpop.permute.xlu0 %998
    %v1001 = vmul.f32 %v981, %v999
    %v1003 = vrot.slane %v1001, 6
    %1004 = vrot.lane.b32.xlu0 %v1003, 32
    %v1005 = vpop.permute.xlu0 %1004
    %v1006 = vsel %vm92, %v1005, 0
    %1008 = vmatpush.msra.mxu0 0.0
    %1009 = vmatpush.msra.mxu0 0.0
    %1010 = vmatpush.msra.mxu0 0.0
    %1011 = vmatpush.msra.mxu0 0.0
    %1012 = vmatpush.msra.mxu0 0.0
    %1013 = vmatpush.msra.mxu0 0.0
    %1014 = vmatpush.msra.mxu0 0.0
    %1015 = vmatpush.msra.mxu0 0.0
    %1016 = vmatpush.msra.mxu0 0.0
    %1017 = vmatpush.msra.mxu0 0.0
    %1018 = vmatpush.msra.mxu0 0.0
    %1019 = vmatpush.msra.mxu0 0.0
    %1020 = vmatpush.msra.mxu0 %v697
    %1021 = vmatpush.msra.mxu0 %v696
    %1022 = vmatpush.msra.mxu0 %v695
    %1023 = vmatpush.msra.mxu0 %v694
    %1024 = vmatmul.f32.gmra.mxu0 %v1006
    %v1025 = vpop.f32.mrf.mxu0
    %v1026 = vadd.f32 0.0, %v1025
    %1027 = vdwg.mxu0
    %v1028 = vadd.f32 %v729, %v1026
    %v1029 = vxor.u32 %v1028, 2147483648
    %v1030 = vmul.f32 %v1029, 1.442695
    %v1031 = vpow.pop %v1030
    %v1032 = vadd.f32 %v1031, 1.0
    %v1033 = vrcp.pop %v1032
    %v1034 = vmul.f32 %v1032, %v1033
    %v1035 = vsub.f32 1.0, %v1034
    %v1036 = vmul.f32 %v1033, %v1035
    %v1037 = vadd.f32 %v1033, %v1036
    %vm1038 = vweird.f32 %v1032
    %vm1039 = vweird.f32 %v1033
    %vm1040 = vmor %vm1038, %vm1039
    %v1041 = vsel %vm1040, %v1033, %v1037
    %v1042 = vand.u32 2147483647, %v1032
    %vm1043 = vcmp.eq.f32.partialorder %v1042, 8.507059e+37
    %v1044 = vand.u32 %v1032, 2147483648
    %v1045 = vor.u32 1.1754944e-38, %v1044
    %v1046 = vsel %vm1043, %v1045, %v1041
    %v1047 = vmul.f32 1.0, %v1046
    %v1048 = vtanh.pop %v1028
    %v1049 = vsel %vm43, %v1048, %v1047
    %v1051 = vrot.slane %v995, 6
    %v1053 = vmul.f32 %v1049, %v1051
    %1055 = vrot.lane.b32.xlu0 %v1049, 64
    %v1056 = vpop.permute.xlu0 %1055
    %v1058 = vmul.f32 %v1049, %v1056
    %1060 = vrot.lane.b32.xlu0 %v1058, 32
    %v1061 = vpop.permute.xlu0 %1060
    %v1063 = vadd.f32 %v1053, %v1061
    %v1064 = vtanh.pop %v1063
    %1066 = vrot.lane.b32.xlu0 %v1064, 64
    %v1067 = vpop.permute.xlu0 %1066
    %v1069 = vmul.f32 %v1049, %v1067
    %1071 = vrot.lane.b32.xlu0 %v1069, 32
    %v1072 = vpop.permute.xlu0 %1071
    %v1073 = vsel %vm92, %v1072, 0
    %1075 = vmatpush.msra.mxu0 0.0
    %1076 = vmatpush.msra.mxu0 0.0
    %1077 = vmatpush.msra.mxu0 0.0
    %1078 = vmatpush.msra.mxu0 0.0
    %1079 = vmatpush.msra.mxu0 0.0
    %1080 = vmatpush.msra.mxu0 0.0
    %1081 = vmatpush.msra.mxu0 0.0
    %1082 = vmatpush.msra.mxu0 0.0
    %1083 = vmatpush.msra.mxu0 0.0
    %1084 = vmatpush.msra.mxu0 0.0
    %1085 = vmatpush.msra.mxu0 0.0
    %1086 = vmatpush.msra.mxu0 0.0
    %1087 = vmatpush.msra.mxu0 %v697
    %1088 = vmatpush.msra.mxu0 %v696
    %1089 = vmatpush.msra.mxu0 %v695
    %1090 = vmatpush.msra.mxu0 %v694
    %1091 = vmatmul.f32.gmra.mxu0 %v1073
    %v1092 = vpop.f32.mrf.mxu0
    %v1093 = vadd.f32 0.0, %v1092
    %1094 = vdwg.mxu0
    %v1096 = vrot.slane %v1093, 6
    %v1098 = vadd.f32 %v729, %v1096
    %v1099 = vxor.u32 %v1098, 2147483648
    %v1100 = vmul.f32 %v1099, 1.442695
    %v1101 = vpow.pop %v1100
    %v1102 = vadd.f32 %v1101, 1.0
    %v1103 = vrcp.pop %v1102
    %v1104 = vmul.f32 %v1102, %v1103
    %v1105 = vsub.f32 1.0, %v1104
    %v1106 = vmul.f32 %v1103, %v1105
    %v1107 = vadd.f32 %v1103, %v1106
    %vm1108 = vweird.f32 %v1102
    %vm1109 = vweird.f32 %v1103
    %vm1110 = vmor %vm1108, %vm1109
    %v1111 = vsel %vm1110, %v1103, %v1107
    %v1112 = vand.u32 2147483647, %v1102
    %vm1113 = vcmp.eq.f32.partialorder %v1112, 8.507059e+37
    %v1114 = vand.u32 %v1102, 2147483648
    %v1115 = vor.u32 1.1754944e-38, %v1114
    %v1116 = vsel %vm1113, %v1115, %v1111
    %v1117 = vmul.f32 1.0, %v1116
    %v1118 = vtanh.pop %v1098
    %v1119 = vsel %vm43, %v1118, %v1117
    %v1121 = vrot.slane %v1063, 6
    %v1123 = vmul.f32 %v1119, %v1121
    %1125 = vrot.lane.b32.xlu0 %v1119, 64
    %v1126 = vpop.permute.xlu0 %1125
    %v1128 = vmul.f32 %v1119, %v1126
    %1130 = vrot.lane.b32.xlu0 %v1128, 32
    %v1131 = vpop.permute.xlu0 %1130
    %v1133 = vadd.f32 %v1123, %v1131
    %v1134 = vtanh.pop %v1133
    %1136 = vrot.lane.b32.xlu0 %v1134, 64
    %v1137 = vpop.permute.xlu0 %1136
    %v1139 = vmul.f32 %v1119, %v1137
    %v1141 = vrot.slane %v1139, 2
    %1142 = vrot.lane.b32.xlu0 %v1141, 32
    %v1143 = vpop.permute.xlu0 %1142
    %v1144 = vsel %vm92, %v1143, 0
    %1146 = vmatpush.msra.mxu0 0.0
    %1147 = vmatpush.msra.mxu0 0.0
    %1148 = vmatpush.msra.mxu0 0.0
    %1149 = vmatpush.msra.mxu0 0.0
    %1150 = vmatpush.msra.mxu0 0.0
    %1151 = vmatpush.msra.mxu0 0.0
    %1152 = vmatpush.msra.mxu0 0.0
    %1153 = vmatpush.msra.mxu0 0.0
    %1154 = vmatpush.msra.mxu0 0.0
    %1155 = vmatpush.msra.mxu0 0.0
    %1156 = vmatpush.msra.mxu0 0.0
    %1157 = vmatpush.msra.mxu0 0.0
    %1158 = vmatpush.msra.mxu0 %v697
    %1159 = vmatpush.msra.mxu0 %v696
    %1160 = vmatpush.msra.mxu0 %v695
    %1161 = vmatpush.msra.mxu0 %v694
    %1162 = vmatmul.f32.gmra.mxu0 %v1144
    %v1163 = vpop.f32.mrf.mxu0
    %v1164 = vadd.f32 0.0, %v1163
    %1165 = vdwg.mxu0
    %v1167 = vrot.slane %v1164, 4
    %v1169 = vadd.f32 %v729, %v1167
    %v1170 = vxor.u32 %v1169, 2147483648
    %v1171 = vmul.f32 %v1170, 1.442695
    %v1172 = vpow.pop %v1171
    %v1173 = vadd.f32 %v1172, 1.0
    %v1174 = vrcp.pop %v1173
    %v1175 = vmul.f32 %v1173, %v1174
    %v1176 = vsub.f32 1.0, %v1175
    %v1177 = vmul.f32 %v1174, %v1176
    %v1178 = vadd.f32 %v1174, %v1177
    %vm1179 = vweird.f32 %v1173
    %vm1180 = vweird.f32 %v1174
    %vm1181 = vmor %vm1179, %vm1180
    %v1182 = vsel %vm1181, %v1174, %v1178
    %v1183 = vand.u32 2147483647, %v1173
    %vm1184 = vcmp.eq.f32.partialorder %v1183, 8.507059e+37
    %v1185 = vand.u32 %v1173, 2147483648
    %v1186 = vor.u32 1.1754944e-38, %v1185
    %v1187 = vsel %vm1184, %v1186, %v1182
    %v1188 = vmul.f32 1.0, %v1187
    %v1189 = vtanh.pop %v1169
    %v1190 = vsel %vm43, %v1189, %v1188
    %v1192 = vrot.slane %v1133, 6
    %v1194 = vmul.f32 %v1190, %v1192
    %1196 = vrot.lane.b32.xlu0 %v1190, 64
    %v1197 = vpop.permute.xlu0 %1196
    %v1199 = vmul.f32 %v1190, %v1197
    %1201 = vrot.lane.b32.xlu0 %v1199, 32
    %v1202 = vpop.permute.xlu0 %1201
    %v1204 = vadd.f32 %v1194, %v1202
    %v1205 = vtanh.pop %v1204
    %1207 = vrot.lane.b32.xlu0 %v1205, 64
    %v1208 = vpop.permute.xlu0 %1207
    %v1210 = vmul.f32 %v1190, %v1208
    %v1212 = vrot.slane %v1210, 4
    %1213 = vrot.lane.b32.xlu0 %v1212, 32
    %v1214 = vpop.permute.xlu0 %1213
    %v1215 = vsel %vm92, %v1214, 0
    %1217 = vmatpush.msra.mxu0 0.0
    %1218 = vmatpush.msra.mxu0 0.0
    %1219 = vmatpush.msra.mxu0 0.0
    %1220 = vmatpush.msra.mxu0 0.0
    %1221 = vmatpush.msra.mxu0 0.0
    %1222 = vmatpush.msra.mxu0 0.0
    %1223 = vmatpush.msra.mxu0 0.0
    %1224 = vmatpush.msra.mxu0 0.0
    %1225 = vmatpush.msra.mxu0 0.0
    %1226 = vmatpush.msra.mxu0 0.0
    %1227 = vmatpush.msra.mxu0 0.0
    %1228 = vmatpush.msra.mxu0 0.0
    %1229 = vmatpush.msra.mxu0 %v697
    %1230 = vmatpush.msra.mxu0 %v696
    %1231 = vmatpush.msra.mxu0 %v695
    %1232 = vmatpush.msra.mxu0 %v694
    %1233 = vmatmul.f32.gmra.mxu0 %v1215
    %v1234 = vpop.f32.mrf.mxu0
    %v1235 = vadd.f32 0.0, %v1234
    %1236 = vdwg.mxu0
    %v1238 = vrot.slane %v1235, 2
    %v1240 = vadd.f32 %v729, %v1238
    %v1241 = vxor.u32 %v1240, 2147483648
    %v1242 = vmul.f32 %v1241, 1.442695
    %v1243 = vpow.pop %v1242
    %v1244 = vadd.f32 %v1243, 1.0
    %v1245 = vrcp.pop %v1244
    %v1246 = vmul.f32 %v1244, %v1245
    %v1247 = vsub.f32 1.0, %v1246
    %v1248 = vmul.f32 %v1245, %v1247
    %v1249 = vadd.f32 %v1245, %v1248
    %vm1250 = vweird.f32 %v1244
    %vm1251 = vweird.f32 %v1245
    %vm1252 = vmor %vm1250, %vm1251
    %v1253 = vsel %vm1252, %v1245, %v1249
    %v1254 = vand.u32 2147483647, %v1244
    %vm1255 = vcmp.eq.f32.partialorder %v1254, 8.507059e+37
    %v1256 = vand.u32 %v1244, 2147483648
    %v1257 = vor.u32 1.1754944e-38, %v1256
    %v1258 = vsel %vm1255, %v1257, %v1253
    %v1259 = vmul.f32 1.0, %v1258
    %v1260 = vtanh.pop %v1240
    %v1261 = vsel %vm43, %v1260, %v1259
    %v1263 = vrot.slane %v1204, 6
    %v1265 = vmul.f32 %v1261, %v1263
    %1267 = vrot.lane.b32.xlu0 %v1261, 64
    %v1268 = vpop.permute.xlu0 %1267
    %v1270 = vmul.f32 %v1261, %v1268
    %1272 = vrot.lane.b32.xlu0 %v1270, 32
    %v1273 = vpop.permute.xlu0 %1272
    %v1275 = vadd.f32 %v1265, %v1273
    %v1276 = vtanh.pop %v1275
    %1278 = vrot.lane.b32.xlu0 %v1276, 64
    %v1279 = vpop.permute.xlu0 %1278
    %v1281 = vmul.f32 %v1261, %v1279
    %v1282 = vrot.slane %v674, 6
    %v1285 = vrot.slane %v1281, 4
    %vm1287 = vcmask 1041408
    %v1288 = vsel %vm1287, %v1282, %v1285
    %v1289 = vmax.f32 %v1288, 0.0
    %v1290 = vld [vmem:[%s7] sm:$0xf]
    %v1291 = vld [vmem:[%s7 + $0x4] sm:$0xf]
    %v1292 = vld [vmem:[%s7 + $0x8] sm:$0xf]
    %v1293 = vld [vmem:[%s7 + $0xc] sm:$0xf]
    %v1294 = vunpack.c.l.bf16 %v1290
    %v1295 = vunpack.c.l.bf16 %v1291
    %v1296 = vunpack.c.l.bf16 %v1292
    %v1297 = vunpack.c.l.bf16 %v1293
    %v1298 = vld [vmem:[%s8] sm:$0x1]
    %v1300 = vperm.slane %v1298, 0
    %1303 = vrot.lane.b32.xlu0 %v1289, 32
    %v1304 = vpop.permute.xlu0 %1303
    %v1305 = vsel %vm92, %v1304, 0
    %1307 = vmatpush.msra.mxu0 0.0
    %1308 = vmatpush.msra.mxu0 0.0
    %1309 = vmatpush.msra.mxu0 0.0
    %1310 = vmatpush.msra.mxu0 0.0
    %1311 = vmatpush.msra.mxu0 0.0
    %1312 = vmatpush.msra.mxu0 0.0
    %1313 = vmatpush.msra.mxu0 0.0
    %1314 = vmatpush.msra.mxu0 0.0
    %1315 = vmatpush.msra.mxu0 0.0
    %1316 = vmatpush.msra.mxu0 0.0
    %1317 = vmatpush.msra.mxu0 0.0
    %1318 = vmatpush.msra.mxu0 0.0
    %1319 = vmatpush.msra.mxu0 %v1297
    %1320 = vmatpush.msra.mxu0 %v1296
    %1321 = vmatpush.msra.mxu0 %v1295
    %1322 = vmatpush.msra.mxu0 %v1294
    %1323 = vmatmul.f32.gmra.mxu0 %v1305
    %v1324 = vpop.f32.mrf.mxu0
    %v1325 = vadd.f32 %v1300, %v1324
    %1326 = vdwg.mxu0
    %v1327 = vmax.f32 %v1325, 0.0
    %v1328 = vld [vmem:[%s9] sm:$0xff]
    %v1329 = vld [vmem:[%s9 + $0x8] sm:$0xff]
    %v1330 = vld [vmem:[%s9 + $0x10] sm:$0xff]
    %v1331 = vld [vmem:[%s9 + $0x18] sm:$0xff]
    %v1332 = vld [vmem:[%s9 + $0x20] sm:$0xff]
    %v1333 = vld [vmem:[%s9 + $0x28] sm:$0xff]
    %v1334 = vld [vmem:[%s9 + $0x30] sm:$0xff]
    %v1335 = vld [vmem:[%s9 + $0x38] sm:$0xff]
    %v1336 = vld [vmem:[%s9 + $0x40] sm:$0xff]
    %v1337 = vld [vmem:[%s9 + $0x48] sm:$0xff]
    %v1338 = vld [vmem:[%s9 + $0x50] sm:$0xff]
    %v1339 = vld [vmem:[%s9 + $0x58] sm:$0xff]
    %v1340 = vld [vmem:[%s9 + $0x60] sm:$0xff]
    %v1341 = vld [vmem:[%s9 + $0x68] sm:$0xff]
    %v1342 = vld [vmem:[%s9 + $0x70] sm:$0xff]
    %v1343 = vld [vmem:[%s9 + $0x78] sm:$0xff]
    %v1344 = vld [vmem:[%s10] sm:$0x1]
    %v1346 = vperm.slane %v1344, 0
    %1348 = vmatpush.msra.mxu0 %v1343
    %1349 = vmatpush.msra.mxu0 %v1342
    %1350 = vmatpush.msra.mxu0 %v1341
    %1351 = vmatpush.msra.mxu0 %v1340
    %1352 = vmatpush.msra.mxu0 %v1339
    %1353 = vmatpush.msra.mxu0 %v1338
    %1354 = vmatpush.msra.mxu0 %v1337
    %1355 = vmatpush.msra.mxu0 %v1336
    %1356 = vmatpush.msra.mxu0 %v1335
    %1357 = vmatpush.msra.mxu0 %v1334
    %1358 = vmatpush.msra.mxu0 %v1333
    %1359 = vmatpush.msra.mxu0 %v1332
    %1360 = vmatpush.msra.mxu0 %v1331
    %1361 = vmatpush.msra.mxu0 %v1330
    %1362 = vmatpush.msra.mxu0 %v1329
    %1363 = vmatpush.msra.mxu0 %v1328
    %1364 = vmatmul.f32.gmra.mxu0 %v1327
    %v1365 = vpop.f32.mrf.mxu0
    %v1366 = vadd.f32 %v1346, %v1365
    %1367 = vdwg.mxu0
    %1368 = vst [vmem:[#allocation3] sm:$0xf] %v1366
    // Predicated region
    $region46: #{lstm1_forward.1} parent=1 // pred_check
      _
    $region47: #{lstm1_forward.1} parent=1 // pred_check_branch
      %1370 = sbr.rel (0) target = $region49
    $region48: #{lstm1_forward.1} parent=1 // pred_region
      %1372 = vsyncadd [#allocation4], 0
      %s1374 = sshll.u32 [#allocation3], 4
      %s1375 = int_to_ptr.vmem [resolvable:$true] %s1374
      %s1376 = sshll.u32 %s11, 4
      %s1377 = int_to_ptr.hbm [resolvable:$true] %s1376
      %1379 = dma.vmem_to_hbm [thread:$0]  %s1375, 64, %s1377, [#allocation4]
    $region49: #{lstm1_forward.1} parent=1 // pred_fallthru
      _
    // Predicated region
    $region50: #{lstm1_forward.1} parent=1 // pred_check
      _
    $region51: #{lstm1_forward.1} parent=1 // pred_check_branch
      %1381 = sbr.rel (0) target = $region53
    $region52: #{lstm1_forward.1} parent=1 // pred_region
      %1383 = dma.done [#allocation4], 64
    $region53: #{lstm1_forward.1} parent=1 // pred_fallthru
      _
    %1384 = vsyncpa [#allocation4], 1

</llo_original>
